<compile_context>
chip_gen: v7x
topology: tpu7x:2x2x1
jax: 0.10.0
libtpu: 0.0.40
codegen_flags: <defaults>
</compile_context>

<pallas_src>
import functools

import jax
import jax.numpy as jnp
import numpy as np
from jax import lax
from jax.experimental import pallas as pl
from jax.experimental.pallas import tpu as pltpu

_CHUNK = 512  # pixels per in-kernel compute chunk (lane axis)


def _wce_kernel(logits_ref, tgt_ref, sns_ref, out_ref, acc_ref, *,
                gamma, old_cl, threshold, ignore_index, ukd,
                chunk, num_chunks, tile_px, hw, mask_lanes):
    """Grid = (batch, pixel-tile). acc_ref: (1, chunk) f32 running per-lane loss."""
    j = pl.program_id(1)

    @pl.when(j == 0)
    def _():
        acc_ref[...] = jnp.zeros_like(acc_ref)

    c = logits_ref.shape[1]
    tiny = jnp.float32(1e-37)
    cutoff = jnp.float32(1e-30)
    thr = jnp.float32(threshold)
    one = jnp.float32(1.0)
    zero = jnp.float32(0.0)

    # Hoisted per-tile constants (JAX does not CSE broadcast/iota inside loops).
    cls = lax.broadcasted_iota(jnp.int32, (c, chunk), 0)
    if mask_lanes:
        lane = lax.broadcasted_iota(jnp.int32, (1, chunk), 1)
        tile_start = j * tile_px

    def _chunk_body(ci, carry):
        if chunk % 128 == 0:
            base = pl.multiple_of(ci * chunk, 128)
        else:
            base = ci * chunk
        x = logits_ref[0, :, pl.ds(base, chunk)].astype(jnp.float32)   # (C, S)
        t = tgt_ref[0, :, pl.ds(base, chunk)].astype(jnp.int32)        # (1, S)
        sns = sns_ref[0, :, pl.ds(base, chunk)].astype(jnp.float32)    # (K, S)

        # --- one shared exp pass drives all three logsumexps -------------------
        m_all = jnp.max(x, axis=0, keepdims=True)                      # (1, S)
        e = jnp.exp(x - m_all)                                         # (C, S) single EUP pass
        sum_all = jnp.sum(e, axis=0, keepdims=True)
        den = m_all + jnp.log(sum_all)                                 # logsumexp, all classes

        # Foreground classes 1..C-1. If the shared-max sum underflows, fall back to
        # the subset max (bounds the error to log(C-1) instead of saturating).
        sum_fg = sum_all - e[0:1, :]
        m_fg = jnp.max(x[1:, :], axis=0, keepdims=True)
        lse_fg = jnp.where(sum_fg > cutoff,
                           m_all + jnp.log(jnp.maximum(sum_fg, tiny)), m_fg)

        # Old classes 0..old_cl-1: static slice (no compare+select mask).
        sum_old = jnp.sum(e[:old_cl, :], axis=0, keepdims=True)
        m_old = jnp.max(x[:old_cl, :], axis=0, keepdims=True)
        lse_old = jnp.where(sum_old > cutoff,
                            m_all + jnp.log(jnp.maximum(sum_old, tiny)), m_old)

        valid = t != ignore_index                                      # (1, S)
        if mask_lanes:
            valid = jnp.logical_and(valid, tile_start + base + lane < hw)

        # --- focal modulation (background pixels only) --------------------------
        masked_t = jnp.where(t == ignore_index, 0, t)
        max_sns = jnp.max(sns, axis=0, keepdims=True)
        clamped = jnp.where(max_sns > thr, one, max_sns)
        w = jnp.where(masked_t == 0, clamped, zero)
        one_minus_w = one - w
        if isinstance(gamma, (int, np.integer)):
            focal = lax.integer_pow(one_minus_w, int(gamma))           # VPU mults, no EUP
        else:
            focal = one_minus_w ** jnp.float32(gamma)

        # --- bg-vs-fg NLL (mask AFTER the focal multiply so padded-lane NaNs die) --
        sel_bgfg = jnp.where(t == 0, x[0:1, :] - den, lse_fg - den)
        loss_bgfg = jnp.where(valid, -sel_bgfg * focal, zero)

        # --- new-vs-rest NLL ------------------------------------------------------
        label_nvr = jnp.where(t < old_cl, 0, t)
        gathered = jnp.sum(jnp.where(cls == label_nvr, x, zero), axis=0, keepdims=True)
        val0 = (lse_old - den) if ukd else jnp.zeros_like(den)
        sel_nvr = jnp.where(label_nvr == 0, val0, gathered - den)
        loss_nvr = jnp.where(valid, -sel_nvr, zero)

        acc_ref[...] = acc_ref[...] + (loss_bgfg + loss_nvr)
        return carry

    lax.fori_loop(0, num_chunks, _chunk_body, 0, unroll=True)

    @pl.when(j == pl.num_programs(1) - 1)
    def _():
        out_ref[0] = acc_ref[...]


def _round_down(v, m):
    return (v // m) * m


def _choose_tiling(hw, bytes_per_pixel, want_pixels):
    """Pick (chunk, tile) pixel sizes: chunk bounds the vreg working set, tile the DMA block."""
    if hw <= 128:
        chunk = hw                                  # full-dim lane block (allowed by Mosaic)
    else:
        chunk = min(_CHUNK, _round_down(hw, 128))   # multiple of 128
    try:
        vmem_cap = int(pltpu.get_tpu_info().vmem_capacity_bytes)
    except Exception:
        vmem_cap = 64 * 1024 * 1024                 # conservative: v7x per-core VMEM
    # Double-buffered input blocks should use <= ~45% of VMEM (rest: temps + headroom).
    io_budget = min(int(vmem_cap * 0.45), 40 * 1024 * 1024)
    max_tile_io = max(chunk, _round_down(io_budget // (2 * bytes_per_pixel), chunk))
    want = max(chunk, _round_down(int(want_pixels), chunk))
    hw_cap = max(chunk, _round_down(hw, chunk))
    tile = min(want, hw_cap, max_tile_io)
    return chunk, tile, vmem_cap


def weighted_cross_entropy(inputs, targets, seen_not_seen_probs, *,
                           gamma=2, old_cl=None, threshold=0.5,
                           ignore_index=255, ukd=True, tile_pixels=8192):
    """inputs: (N, C, H, W); targets: (N, H, W) int; seen_not_seen_probs: (N, K, H, W)."""
    assert old_cl is not None and old_cl >= 1, "old_cl must be provided"
    n, c, h, wd = inputs.shape
    hw = h * wd
    p = n * hw
    k = seen_not_seen_probs.shape[1]

    # Free reshapes only (no transpose): pixels -> lanes, classes -> sublanes.
    x = inputs.reshape(n, c, hw)
    t = targets.reshape(n, 1, hw)
    s = seen_not_seen_probs.reshape(n, k, hw)

    bytes_per_pixel = c * x.dtype.itemsize + t.dtype.itemsize + k * s.dtype.itemsize
    chunk, tp, vmem_cap = _choose_tiling(hw, bytes_per_pixel, tile_pixels)
    num_chunks = tp // chunk
    grid_j = pl.cdiv(hw, tp)
    mask_lanes = (hw % tp) != 0

    kernel = functools.partial(
        _wce_kernel, gamma=gamma, old_cl=int(old_cl), threshold=threshold,
        ignore_index=ignore_index, ukd=ukd, chunk=chunk, num_chunks=num_chunks,
        tile_px=tp, hw=hw, mask_lanes=mask_lanes)

    # VMEM budget: double-buffered input blocks + f32 chunk temporaries + headroom.
    io_bytes = 2 * tp * bytes_per_pixel
    temp_bytes = (4 * c + k + 48) * chunk * 4
    needed = io_bytes + temp_bytes + 3 * chunk * 4 + (2 << 20)
    vmem_limit = int(min(int(vmem_cap * 0.7), max(32 << 20, needed)))

    out = pl.pallas_call(
        kernel,
        out_shape=jax.ShapeDtypeStruct((n, 1, chunk), jnp.float32),
        grid_spec=pltpu.PrefetchScalarGridSpec(
            num_scalar_prefetch=0,
            grid=(n, grid_j),
            in_specs=[
                pl.BlockSpec((1, c, tp), lambda ni, ji: (ni, 0, ji)),
                pl.BlockSpec((1, 1, tp), lambda ni, ji: (ni, 0, ji)),
                pl.BlockSpec((1, k, tp), lambda ni, ji: (ni, 0, ji)),
            ],
            out_specs=pl.BlockSpec((1, 1, chunk), lambda ni, ji: (ni, 0, 0)),
            scratch_shapes=[pltpu.VMEM((1, chunk), jnp.float32)],
        ),
        compiler_params=pltpu.CompilerParams(
            dimension_semantics=("parallel", "arbitrary"),
            vmem_limit_bytes=vmem_limit),
    )(x, t, s)
    # Per-batch, per-lane partial sums -> final mean over all N*H*W pixels.
    return jnp.sum(out) / jnp.float32(p)


def _reference(inputs, targets, sns, *, gamma, old_cl, threshold, ignore_index, ukd):
    n, c, h, wd = inputs.shape
    p = n * h * wd
    x = jnp.transpose(inputs, (0, 2, 3, 1)).reshape(p, c).astype(jnp.float32)
    t = targets.reshape(p).astype(jnp.int32)
    s = jnp.transpose(sns, (0, 2, 3, 1)).reshape(p, -1).astype(jnp.float32)

    den = jax.scipy.special.logsumexp(x, axis=1)
    lse_fg = jax.scipy.special.logsumexp(x[:, 1:], axis=1)
    lse_old = jax.scipy.special.logsumexp(x[:, :old_cl], axis=1)

    ignore = t == ignore_index
    valid = ~ignore
    masked_t = jnp.where(ignore, 0, t)

    max_sns = jnp.max(s, axis=1)
    clamped = jnp.where(max_sns > threshold, 1.0, max_sns)
    w = jnp.where(masked_t == 0, clamped, 0.0)
    focal = (1.0 - w) ** gamma

    sel_bgfg = jnp.where(t == 0, x[:, 0] - den, lse_fg - den)
    loss_bgfg = jnp.where(valid, -sel_bgfg, 0.0) * focal

    label_nvr = jnp.where(t < old_cl, 0, t)
    gathered = jnp.take_along_axis(
        x, jnp.where(valid, label_nvr, 0)[:, None], axis=1)[:, 0]
    val0 = (lse_old - den) if ukd else jnp.zeros_like(den)
    sel_nvr = jnp.where(label_nvr == 0, val0, gathered - den)
    loss_nvr = jnp.where(valid, -sel_nvr, 0.0)
    return jnp.mean(loss_bgfg + loss_nvr)


if __name__ == "__main__":
    # (N, C, H, W) segmentation logits; targets with ~10% ignore (255) pixels;
    # seen_not_seen_probs (N, 2, H, W). Spatial 40x40 exercises the multi-chunk
    # loop, the partial last pixel tile, and the in-kernel lane mask.
    N, C, H, W = 2, 8, 40, 40
    OLD_CL = 4
    IGNORE = 255

    key = jax.random.PRNGKey(0)
    k1, k2, k3, k4 = jax.random.split(key, 4)
    inputs = jax.random.normal(k1, (N, C, H, W), dtype=jnp.float32)
    targets = jax.random.randint(k2, (N, H, W), 0, C, dtype=jnp.int32)
    ignore_mask = jax.random.uniform(k3, (N, H, W)) < 0.1
    targets = jnp.where(ignore_mask, IGNORE, targets)
    sns = jax.random.uniform(k4, (N, 2, H, W), dtype=jnp.float32)

    loss = weighted_cross_entropy(
        inputs, targets, sns,
        gamma=2, old_cl=OLD_CL, threshold=0.5, ignore_index=IGNORE, ukd=True)
    loss = jax.block_until_ready(loss)

    ref = _reference(
        inputs, targets, sns,
        gamma=2, old_cl=OLD_CL, threshold=0.5, ignore_index=IGNORE, ukd=True)
    ref = jax.block_until_ready(ref)

    if not np.allclose(np.asarray(loss), np.asarray(ref), rtol=1e-4, atol=1e-4):
        raise AssertionError(f"mismatch: kernel={loss} ref={ref}")
    print("KERNEL_OK")
</pallas_src>

<mosaic_0001>
module attributes {stable_mosaic.version = 11 : i64} {
  func.func @_wce_kernel(%arg0: i32, %arg1: i32, %arg2: memref<1x8x1536xf32, #tpu.memory_space<vmem>>, %arg3: memref<1x1x1536xi32, #tpu.memory_space<vmem>>, %arg4: memref<1x2x1536xf32, #tpu.memory_space<vmem>>, %arg5: memref<1x1x512xf32, #tpu.memory_space<vmem>>, %arg6: memref<1x512xf32, #tpu.memory_space<vmem>>) attributes {dimension_semantics = [#tpu.dimension_semantics<parallel>, #tpu.dimension_semantics<arbitrary>], iteration_bounds = array<i64: 2, 2>, scalar_prefetch = 0 : i64, scratch_operands = 1 : i64, tpu.core_type = #tpu.core_type<tc>, window_params = [{transform_indices = @transform_0, window_bounds = array<i64: 1, 8, 1536>}, {transform_indices = @transform_1, window_bounds = array<i64: 1, 1, 1536>}, {transform_indices = @transform_2, window_bounds = array<i64: 1, 2, 1536>}, {transform_indices = @transform_3, window_bounds = array<i64: 1, 1, 512>}]} {
    %c0_i32 = arith.constant 0 : i32
    %0 = arith.cmpi eq, %arg1, %c0_i32 : i32
    %1 = arith.extui %0 : i1 to i32
    %c0_i32_0 = arith.constant 0 : i32
    %2 = arith.cmpi ne, %1, %c0_i32_0 : i32
    scf.if %2 {
      %cst_90 = arith.constant 0.000000e+00 : f32
      %321 = vector.broadcast %cst_90 : f32 to vector<1x512xf32>
      %c0_91 = arith.constant 0 : index
      %c0_92 = arith.constant 0 : index
      %322 = vector.load %arg6[%c0_91, %c0_92] : memref<1x512xf32, #tpu.memory_space<vmem>>, vector<1x512xf32>
      tpu.vector_store %arg6[%c0_91, %c0_92], %321 {strides = array<i32>} : memref<1x512xf32, #tpu.memory_space<vmem>>, vector<1x512xf32>,
    } else {
    }
    %3 = tpu.iota {dimensions = array<i32: 0>} : vector<8x512xi32>
    %4 = tpu.iota {dimensions = array<i32: 1>} : vector<1x512xi32>
    %c1536_i32 = arith.constant 1536 : i32
    %5 = arith.muli %arg1, %c1536_i32 : i32
    %cst = arith.constant 1.000000e-30 : f32
    %cst_1 = arith.constant 9.99999991E-38 : f32
    %cst_2 = arith.constant 5.000000e-01 : f32
    %cst_3 = arith.constant 1.000000e+00 : f32
    %cst_4 = arith.constant 0.000000e+00 : f32
    %c0_i32_5 = arith.constant 0 : i32
    %c512_i32 = arith.constant 512 : i32
    %6 = arith.muli %c0_i32_5, %c512_i32 : i32
    %7 = tpu.assume_multiple %6, 128 : i32
    %c0 = arith.constant 0 : index
    %c0_6 = arith.constant 0 : index
    %8 = arith.index_cast %7 : i32 to index
    %9 = vector.load %arg2[%c0, %c0_6, %8] : memref<1x8x1536xf32, #tpu.memory_space<vmem>>, vector<1x8x512xf32>
    %10 = vector.shape_cast %9 : vector<1x8x512xf32> to vector<8x512xf32>
    %c0_7 = arith.constant 0 : index
    %c0_8 = arith.constant 0 : index
    %11 = arith.index_cast %7 : i32 to index
    %12 = vector.load %arg3[%c0_7, %c0_8, %11] : memref<1x1x1536xi32, #tpu.memory_space<vmem>>, vector<1x1x512xi32>
    %13 = vector.shape_cast %12 : vector<1x1x512xi32> to vector<1x512xi32>
    %c0_9 = arith.constant 0 : index
    %c0_10 = arith.constant 0 : index
    %14 = arith.index_cast %7 : i32 to index
    %15 = vector.load %arg4[%c0_9, %c0_10, %14] : memref<1x2x1536xf32, #tpu.memory_space<vmem>>, vector<1x2x512xf32>
    %16 = vector.shape_cast %15 : vector<1x2x512xf32> to vector<2x512xf32>
    %cst_11 = arith.constant dense<0xFF800000> : vector<512xf32>
    %17 = vector.multi_reduction <maximumf>, %10, %cst_11 [0] : vector<8x512xf32> to vector<512xf32>
    %18 = vector.shape_cast %17 : vector<512xf32> to vector<1x512xf32>
    %19 = vector.broadcast %18 : vector<1x512xf32> to vector<8x512xf32>
    %20 = arith.subf %10, %19 : vector<8x512xf32>
    %21 = math.exp %20 : vector<8x512xf32>
    %cst_12 = arith.constant dense<0.000000e+00> : vector<512xf32>
    %22 = vector.multi_reduction <add>, %21, %cst_12 [0] : vector<8x512xf32> to vector<512xf32>
    %23 = vector.shape_cast %22 : vector<512xf32> to vector<1x512xf32>
    %24 = math.log %23 : vector<1x512xf32>
    %25 = arith.addf %18, %24 : vector<1x512xf32>
    %26 = vector.extract_strided_slice %21 {offsets = [0, 0], sizes = [1, 512], strides = [1, 1]} : vector<8x512xf32> to vector<1x512xf32>
    %27 = arith.subf %23, %26 : vector<1x512xf32>
    %28 = vector.extract_strided_slice %10 {offsets = [1, 0], sizes = [7, 512], strides = [1, 1]} : vector<8x512xf32> to vector<7x512xf32>
    %cst_13 = arith.constant dense<0xFF800000> : vector<512xf32>
    %29 = vector.multi_reduction <maximumf>, %28, %cst_13 [0] : vector<7x512xf32> to vector<512xf32>
    %30 = vector.shape_cast %29 : vector<512xf32> to vector<1x512xf32>
    %31 = vector.broadcast %cst : f32 to vector<1x512xf32>
    %32 = arith.cmpf ogt, %27, %31 : vector<1x512xf32>
    %33 = vector.broadcast %cst_1 : f32 to vector<1x512xf32>
    %34 = arith.maximumf %27, %33 : vector<1x512xf32>
    %35 = math.log %34 : vector<1x512xf32>
    %36 = arith.addf %18, %35 : vector<1x512xf32>
    %37 = arith.select %32, %36, %30 : vector<1x512xi1>, vector<1x512xf32>
    %38 = vector.extract_strided_slice %21 {offsets = [0, 0], sizes = [4, 512], strides = [1, 1]} : vector<8x512xf32> to vector<4x512xf32>
    %cst_14 = arith.constant dense<0.000000e+00> : vector<512xf32>
    %39 = vector.multi_reduction <add>, %38, %cst_14 [0] : vector<4x512xf32> to vector<512xf32>
    %40 = vector.shape_cast %39 : vector<512xf32> to vector<1x512xf32>
    %41 = vector.extract_strided_slice %10 {offsets = [0, 0], sizes = [4, 512], strides = [1, 1]} : vector<8x512xf32> to vector<4x512xf32>
    %cst_15 = arith.constant dense<0xFF800000> : vector<512xf32>
    %42 = vector.multi_reduction <maximumf>, %41, %cst_15 [0] : vector<4x512xf32> to vector<512xf32>
    %43 = vector.shape_cast %42 : vector<512xf32> to vector<1x512xf32>
    %44 = vector.broadcast %cst : f32 to vector<1x512xf32>
    %45 = arith.cmpf ogt, %40, %44 : vector<1x512xf32>
    %46 = vector.broadcast %cst_1 : f32 to vector<1x512xf32>
    %47 = arith.maximumf %40, %46 : vector<1x512xf32>
    %48 = math.log %47 : vector<1x512xf32>
    %49 = arith.addf %18, %48 : vector<1x512xf32>
    %50 = arith.select %45, %49, %43 : vector<1x512xi1>, vector<1x512xf32>
    %c255_i32 = arith.constant 255 : i32
    %51 = vector.broadcast %c255_i32 : i32 to vector<1x512xi32>
    %52 = arith.cmpi ne, %13, %51 : vector<1x512xi32>
    %53 = arith.addi %5, %7 : i32
    %54 = vector.broadcast %53 : i32 to vector<1x512xi32>
    %55 = arith.addi %54, %4 : vector<1x512xi32>
    %c1600_i32 = arith.constant 1600 : i32
    %56 = vector.broadcast %c1600_i32 : i32 to vector<1x512xi32>
    %57 = arith.cmpi slt, %55, %56 : vector<1x512xi32>
    %58 = arith.andi %52, %57 : vector<1x512xi1>
    %c255_i32_16 = arith.constant 255 : i32
    %59 = vector.broadcast %c255_i32_16 : i32 to vector<1x512xi32>
    %60 = arith.cmpi eq, %13, %59 : vector<1x512xi32>
    %c0_i32_17 = arith.constant 0 : i32
    %61 = vector.broadcast %c0_i32_17 : i32 to vector<1x512xi32>
    %62 = arith.select %60, %61, %13 : vector<1x512xi1>, vector<1x512xi32>
    %cst_18 = arith.constant dense<0xFF800000> : vector<512xf32>
    %63 = vector.multi_reduction <maximumf>, %16, %cst_18 [0] : vector<2x512xf32> to vector<512xf32>
    %64 = vector.shape_cast %63 : vector<512xf32> to vector<1x512xf32>
    %65 = vector.broadcast %cst_2 : f32 to vector<1x512xf32>
    %66 = arith.cmpf ogt, %64, %65 : vector<1x512xf32>
    %67 = vector.broadcast %cst_3 : f32 to vector<1x512xf32>
    %68 = arith.select %66, %67, %64 : vector<1x512xi1>, vector<1x512xf32>
    %c0_i32_19 = arith.constant 0 : i32
    %69 = vector.broadcast %c0_i32_19 : i32 to vector<1x512xi32>
    %70 = arith.cmpi eq, %62, %69 : vector<1x512xi32>
    %71 = vector.broadcast %cst_4 : f32 to vector<1x512xf32>
    %72 = arith.select %70, %68, %71 : vector<1x512xi1>, vector<1x512xf32>
    %73 = vector.broadcast %cst_3 : f32 to vector<1x512xf32>
    %74 = arith.subf %73, %72 : vector<1x512xf32>
    %75 = arith.mulf %74, %74 : vector<1x512xf32>
    %c0_i32_20 = arith.constant 0 : i32
    %76 = vector.broadcast %c0_i32_20 : i32 to vector<1x512xi32>
    %77 = arith.cmpi eq, %13, %76 : vector<1x512xi32>
    %78 = vector.extract_strided_slice %10 {offsets = [0, 0], sizes = [1, 512], strides = [1, 1]} : vector<8x512xf32> to vector<1x512xf32>
    %79 = arith.subf %78, %25 : vector<1x512xf32>
    %80 = arith.subf %37, %25 : vector<1x512xf32>
    %81 = arith.select %77, %79, %80 : vector<1x512xi1>, vector<1x512xf32>
    %cst_21 = arith.constant 0.000000e+00 : f32
    %82 = vector.broadcast %cst_21 : f32 to vector<1x512xf32>
    %83 = arith.subf %82, %81 : vector<1x512xf32>
    %84 = arith.mulf %83, %75 : vector<1x512xf32>
    %85 = vector.broadcast %cst_4 : f32 to vector<1x512xf32>
    %86 = arith.select %58, %84, %85 : vector<1x512xi1>, vector<1x512xf32>
    %c4_i32 = arith.constant 4 : i32
    %87 = vector.broadcast %c4_i32 : i32 to vector<1x512xi32>
    %88 = arith.cmpi slt, %13, %87 : vector<1x512xi32>
    %c0_i32_22 = arith.constant 0 : i32
    %89 = vector.broadcast %c0_i32_22 : i32 to vector<1x512xi32>
    %90 = arith.select %88, %89, %13 : vector<1x512xi1>, vector<1x512xi32>
    %91 = vector.broadcast %90 : vector<1x512xi32> to vector<8x512xi32>
    %92 = arith.cmpi eq, %3, %91 : vector<8x512xi32>
    %93 = vector.broadcast %cst_4 : f32 to vector<8x512xf32>
    %94 = arith.select %92, %10, %93 : vector<8x512xi1>, vector<8x512xf32>
    %cst_23 = arith.constant dense<0.000000e+00> : vector<512xf32>
    %95 = vector.multi_reduction <add>, %94, %cst_23 [0] : vector<8x512xf32> to vector<512xf32>
    %96 = vector.shape_cast %95 : vector<512xf32> to vector<1x512xf32>
    %97 = arith.subf %50, %25 : vector<1x512xf32>
    %c0_i32_24 = arith.constant 0 : i32
    %98 = vector.broadcast %c0_i32_24 : i32 to vector<1x512xi32>
    %99 = arith.cmpi eq, %90, %98 : vector<1x512xi32>
    %100 = arith.subf %96, %25 : vector<1x512xf32>
    %101 = arith.select %99, %97, %100 : vector<1x512xi1>, vector<1x512xf32>
    %cst_25 = arith.constant 0.000000e+00 : f32
    %102 = vector.broadcast %cst_25 : f32 to vector<1x512xf32>
    %103 = arith.subf %102, %101 : vector<1x512xf32>
    %104 = vector.broadcast %cst_4 : f32 to vector<1x512xf32>
    %105 = arith.select %58, %103, %104 : vector<1x512xi1>, vector<1x512xf32>
    %c0_26 = arith.constant 0 : index
    %c0_27 = arith.constant 0 : index
    %106 = vector.load %arg6[%c0_26, %c0_27] : memref<1x512xf32, #tpu.memory_space<vmem>>, vector<1x512xf32>
    %107 = arith.addf %86, %105 : vector<1x512xf32>
    %108 = arith.addf %106, %107 : vector<1x512xf32>
    %c0_28 = arith.constant 0 : index
    %c0_29 = arith.constant 0 : index
    %109 = vector.load %arg6[%c0_28, %c0_29] : memref<1x512xf32, #tpu.memory_space<vmem>>, vector<1x512xf32>
    tpu.vector_store %arg6[%c0_28, %c0_29], %108 {strides = array<i32>} : memref<1x512xf32, #tpu.memory_space<vmem>>, vector<1x512xf32>,
    %c1_i32 = arith.constant 1 : i32
    %c512_i32_30 = arith.constant 512 : i32
    %110 = arith.muli %c1_i32, %c512_i32_30 : i32
    %111 = tpu.assume_multiple %110, 128 : i32
    %c0_31 = arith.constant 0 : index
    %c0_32 = arith.constant 0 : index
    %112 = arith.index_cast %111 : i32 to index
    %113 = vector.load %arg2[%c0_31, %c0_32, %112] : memref<1x8x1536xf32, #tpu.memory_space<vmem>>, vector<1x8x512xf32>
    %114 = vector.shape_cast %113 : vector<1x8x512xf32> to vector<8x512xf32>
    %c0_33 = arith.constant 0 : index
    %c0_34 = arith.constant 0 : index
    %115 = arith.index_cast %111 : i32 to index
    %116 = vector.load %arg3[%c0_33, %c0_34, %115] : memref<1x1x1536xi32, #tpu.memory_space<vmem>>, vector<1x1x512xi32>
    %117 = vector.shape_cast %116 : vector<1x1x512xi32> to vector<1x512xi32>
    %c0_35 = arith.constant 0 : index
    %c0_36 = arith.constant 0 : index
    %118 = arith.index_cast %111 : i32 to index
    %119 = vector.load %arg4[%c0_35, %c0_36, %118] : memref<1x2x1536xf32, #tpu.memory_space<vmem>>, vector<1x2x512xf32>
    %120 = vector.shape_cast %119 : vector<1x2x512xf32> to vector<2x512xf32>
    %cst_37 = arith.constant dense<0xFF800000> : vector<512xf32>
    %121 = vector.multi_reduction <maximumf>, %114, %cst_37 [0] : vector<8x512xf32> to vector<512xf32>
    %122 = vector.shape_cast %121 : vector<512xf32> to vector<1x512xf32>
    %123 = vector.broadcast %122 : vector<1x512xf32> to vector<8x512xf32>
    %124 = arith.subf %114, %123 : vector<8x512xf32>
    %125 = math.exp %124 : vector<8x512xf32>
    %cst_38 = arith.constant dense<0.000000e+00> : vector<512xf32>
    %126 = vector.multi_reduction <add>, %125, %cst_38 [0] : vector<8x512xf32> to vector<512xf32>
    %127 = vector.shape_cast %126 : vector<512xf32> to vector<1x512xf32>
    %128 = math.log %127 : vector<1x512xf32>
    %129 = arith.addf %122, %128 : vector<1x512xf32>
    %130 = vector.extract_strided_slice %125 {offsets = [0, 0], sizes = [1, 512], strides = [1, 1]} : vector<8x512xf32> to vector<1x512xf32>
    %131 = arith.subf %127, %130 : vector<1x512xf32>
    %132 = vector.extract_strided_slice %114 {offsets = [1, 0], sizes = [7, 512], strides = [1, 1]} : vector<8x512xf32> to vector<7x512xf32>
    %cst_39 = arith.constant dense<0xFF800000> : vector<512xf32>
    %133 = vector.multi_reduction <maximumf>, %132, %cst_39 [0] : vector<7x512xf32> to vector<512xf32>
    %134 = vector.shape_cast %133 : vector<512xf32> to vector<1x512xf32>
    %135 = vector.broadcast %cst : f32 to vector<1x512xf32>
    %136 = arith.cmpf ogt, %131, %135 : vector<1x512xf32>
    %137 = vector.broadcast %cst_1 : f32 to vector<1x512xf32>
    %138 = arith.maximumf %131, %137 : vector<1x512xf32>
    %139 = math.log %138 : vector<1x512xf32>
    %140 = arith.addf %122, %139 : vector<1x512xf32>
    %141 = arith.select %136, %140, %134 : vector<1x512xi1>, vector<1x512xf32>
    %142 = vector.extract_strided_slice %125 {offsets = [0, 0], sizes = [4, 512], strides = [1, 1]} : vector<8x512xf32> to vector<4x512xf32>
    %cst_40 = arith.constant dense<0.000000e+00> : vector<512xf32>
    %143 = vector.multi_reduction <add>, %142, %cst_40 [0] : vector<4x512xf32> to vector<512xf32>
    %144 = vector.shape_cast %143 : vector<512xf32> to vector<1x512xf32>
    %145 = vector.extract_strided_slice %114 {offsets = [0, 0], sizes = [4, 512], strides = [1, 1]} : vector<8x512xf32> to vector<4x512xf32>
    %cst_41 = arith.constant dense<0xFF800000> : vector<512xf32>
    %146 = vector.multi_reduction <maximumf>, %145, %cst_41 [0] : vector<4x512xf32> to vector<512xf32>
    %147 = vector.shape_cast %146 : vector<512xf32> to vector<1x512xf32>
    %148 = vector.broadcast %cst : f32 to vector<1x512xf32>
    %149 = arith.cmpf ogt, %144, %148 : vector<1x512xf32>
    %150 = vector.broadcast %cst_1 : f32 to vector<1x512xf32>
    %151 = arith.maximumf %144, %150 : vector<1x512xf32>
    %152 = math.log %151 : vector<1x512xf32>
    %153 = arith.addf %122, %152 : vector<1x512xf32>
    %154 = arith.select %149, %153, %147 : vector<1x512xi1>, vector<1x512xf32>
    %c255_i32_42 = arith.constant 255 : i32
    %155 = vector.broadcast %c255_i32_42 : i32 to vector<1x512xi32>
    %156 = arith.cmpi ne, %117, %155 : vector<1x512xi32>
    %157 = arith.addi %5, %111 : i32
    %158 = vector.broadcast %157 : i32 to vector<1x512xi32>
    %159 = arith.addi %158, %4 : vector<1x512xi32>
    %c1600_i32_43 = arith.constant 1600 : i32
    %160 = vector.broadcast %c1600_i32_43 : i32 to vector<1x512xi32>
    %161 = arith.cmpi slt, %159, %160 : vector<1x512xi32>
    %162 = arith.andi %156, %161 : vector<1x512xi1>
    %c255_i32_44 = arith.constant 255 : i32
    %163 = vector.broadcast %c255_i32_44 : i32 to vector<1x512xi32>
    %164 = arith.cmpi eq, %117, %163 : vector<1x512xi32>
    %c0_i32_45 = arith.constant 0 : i32
    %165 = vector.broadcast %c0_i32_45 : i32 to vector<1x512xi32>
    %166 = arith.select %164, %165, %117 : vector<1x512xi1>, vector<1x512xi32>
    %cst_46 = arith.constant dense<0xFF800000> : vector<512xf32>
    %167 = vector.multi_reduction <maximumf>, %120, %cst_46 [0] : vector<2x512xf32> to vector<512xf32>
    %168 = vector.shape_cast %167 : vector<512xf32> to vector<1x512xf32>
    %169 = vector.broadcast %cst_2 : f32 to vector<1x512xf32>
    %170 = arith.cmpf ogt, %168, %169 : vector<1x512xf32>
    %171 = vector.broadcast %cst_3 : f32 to vector<1x512xf32>
    %172 = arith.select %170, %171, %168 : vector<1x512xi1>, vector<1x512xf32>
    %c0_i32_47 = arith.constant 0 : i32
    %173 = vector.broadcast %c0_i32_47 : i32 to vector<1x512xi32>
    %174 = arith.cmpi eq, %166, %173 : vector<1x512xi32>
    %175 = vector.broadcast %cst_4 : f32 to vector<1x512xf32>
    %176 = arith.select %174, %172, %175 : vector<1x512xi1>, vector<1x512xf32>
    %177 = vector.broadcast %cst_3 : f32 to vector<1x512xf32>
    %178 = arith.subf %177, %176 : vector<1x512xf32>
    %179 = arith.mulf %178, %178 : vector<1x512xf32>
    %c0_i32_48 = arith.constant 0 : i32
    %180 = vector.broadcast %c0_i32_48 : i32 to vector<1x512xi32>
    %181 = arith.cmpi eq, %117, %180 : vector<1x512xi32>
    %182 = vector.extract_strided_slice %114 {offsets = [0, 0], sizes = [1, 512], strides = [1, 1]} : vector<8x512xf32> to vector<1x512xf32>
    %183 = arith.subf %182, %129 : vector<1x512xf32>
    %184 = arith.subf %141, %129 : vector<1x512xf32>
    %185 = arith.select %181, %183, %184 : vector<1x512xi1>, vector<1x512xf32>
    %cst_49 = arith.constant 0.000000e+00 : f32
    %186 = vector.broadcast %cst_49 : f32 to vector<1x512xf32>
    %187 = arith.subf %186, %185 : vector<1x512xf32>
    %188 = arith.mulf %187, %179 : vector<1x512xf32>
    %189 = vector.broadcast %cst_4 : f32 to vector<1x512xf32>
    %190 = arith.select %162, %188, %189 : vector<1x512xi1>, vector<1x512xf32>
    %c4_i32_50 = arith.constant 4 : i32
    %191 = vector.broadcast %c4_i32_50 : i32 to vector<1x512xi32>
    %192 = arith.cmpi slt, %117, %191 : vector<1x512xi32>
    %c0_i32_51 = arith.constant 0 : i32
    %193 = vector.broadcast %c0_i32_51 : i32 to vector<1x512xi32>
    %194 = arith.select %192, %193, %117 : vector<1x512xi1>, vector<1x512xi32>
    %195 = vector.broadcast %194 : vector<1x512xi32> to vector<8x512xi32>
    %196 = arith.cmpi eq, %3, %195 : vector<8x512xi32>
    %197 = vector.broadcast %cst_4 : f32 to vector<8x512xf32>
    %198 = arith.select %196, %114, %197 : vector<8x512xi1>, vector<8x512xf32>
    %cst_52 = arith.constant dense<0.000000e+00> : vector<512xf32>
    %199 = vector.multi_reduction <add>, %198, %cst_52 [0] : vector<8x512xf32> to vector<512xf32>
    %200 = vector.shape_cast %199 : vector<512xf32> to vector<1x512xf32>
    %201 = arith.subf %154, %129 : vector<1x512xf32>
    %c0_i32_53 = arith.constant 0 : i32
    %202 = vector.broadcast %c0_i32_53 : i32 to vector<1x512xi32>
    %203 = arith.cmpi eq, %194, %202 : vector<1x512xi32>
    %204 = arith.subf %200, %129 : vector<1x512xf32>
    %205 = arith.select %203, %201, %204 : vector<1x512xi1>, vector<1x512xf32>
    %cst_54 = arith.constant 0.000000e+00 : f32
    %206 = vector.broadcast %cst_54 : f32 to vector<1x512xf32>
    %207 = arith.subf %206, %205 : vector<1x512xf32>
    %208 = vector.broadcast %cst_4 : f32 to vector<1x512xf32>
    %209 = arith.select %162, %207, %208 : vector<1x512xi1>, vector<1x512xf32>
    %c0_55 = arith.constant 0 : index
    %c0_56 = arith.constant 0 : index
    %210 = vector.load %arg6[%c0_55, %c0_56] : memref<1x512xf32, #tpu.memory_space<vmem>>, vector<1x512xf32>
    %211 = arith.addf %190, %209 : vector<1x512xf32>
    %212 = arith.addf %210, %211 : vector<1x512xf32>
    %c0_57 = arith.constant 0 : index
    %c0_58 = arith.constant 0 : index
    %213 = vector.load %arg6[%c0_57, %c0_58] : memref<1x512xf32, #tpu.memory_space<vmem>>, vector<1x512xf32>
    tpu.vector_store %arg6[%c0_57, %c0_58], %212 {strides = array<i32>} : memref<1x512xf32, #tpu.memory_space<vmem>>, vector<1x512xf32>,
    %c2_i32 = arith.constant 2 : i32
    %c512_i32_59 = arith.constant 512 : i32
    %214 = arith.muli %c2_i32, %c512_i32_59 : i32
    %215 = tpu.assume_multiple %214, 128 : i32
    %c0_60 = arith.constant 0 : index
    %c0_61 = arith.constant 0 : index
    %216 = arith.index_cast %215 : i32 to index
    %217 = vector.load %arg2[%c0_60, %c0_61, %216] : memref<1x8x1536xf32, #tpu.memory_space<vmem>>, vector<1x8x512xf32>
    %218 = vector.shape_cast %217 : vector<1x8x512xf32> to vector<8x512xf32>
    %c0_62 = arith.constant 0 : index
    %c0_63 = arith.constant 0 : index
    %219 = arith.index_cast %215 : i32 to index
    %220 = vector.load %arg3[%c0_62, %c0_63, %219] : memref<1x1x1536xi32, #tpu.memory_space<vmem>>, vector<1x1x512xi32>
    %221 = vector.shape_cast %220 : vector<1x1x512xi32> to vector<1x512xi32>
    %c0_64 = arith.constant 0 : index
    %c0_65 = arith.constant 0 : index
    %222 = arith.index_cast %215 : i32 to index
    %223 = vector.load %arg4[%c0_64, %c0_65, %222] : memref<1x2x1536xf32, #tpu.memory_space<vmem>>, vector<1x2x512xf32>
    %224 = vector.shape_cast %223 : vector<1x2x512xf32> to vector<2x512xf32>
    %cst_66 = arith.constant dense<0xFF800000> : vector<512xf32>
    %225 = vector.multi_reduction <maximumf>, %218, %cst_66 [0] : vector<8x512xf32> to vector<512xf32>
    %226 = vector.shape_cast %225 : vector<512xf32> to vector<1x512xf32>
    %227 = vector.broadcast %226 : vector<1x512xf32> to vector<8x512xf32>
    %228 = arith.subf %218, %227 : vector<8x512xf32>
    %229 = math.exp %228 : vector<8x512xf32>
    %cst_67 = arith.constant dense<0.000000e+00> : vector<512xf32>
    %230 = vector.multi_reduction <add>, %229, %cst_67 [0] : vector<8x512xf32> to vector<512xf32>
    %231 = vector.shape_cast %230 : vector<512xf32> to vector<1x512xf32>
    %232 = math.log %231 : vector<1x512xf32>
    %233 = arith.addf %226, %232 : vector<1x512xf32>
    %234 = vector.extract_strided_slice %229 {offsets = [0, 0], sizes = [1, 512], strides = [1, 1]} : vector<8x512xf32> to vector<1x512xf32>
    %235 = arith.subf %231, %234 : vector<1x512xf32>
    %236 = vector.extract_strided_slice %218 {offsets = [1, 0], sizes = [7, 512], strides = [1, 1]} : vector<8x512xf32> to vector<7x512xf32>
    %cst_68 = arith.constant dense<0xFF800000> : vector<512xf32>
    %237 = vector.multi_reduction <maximumf>, %236, %cst_68 [0] : vector<7x512xf32> to vector<512xf32>
    %238 = vector.shape_cast %237 : vector<512xf32> to vector<1x512xf32>
    %239 = vector.broadcast %cst : f32 to vector<1x512xf32>
    %240 = arith.cmpf ogt, %235, %239 : vector<1x512xf32>
    %241 = vector.broadcast %cst_1 : f32 to vector<1x512xf32>
    %242 = arith.maximumf %235, %241 : vector<1x512xf32>
    %243 = math.log %242 : vector<1x512xf32>
    %244 = arith.addf %226, %243 : vector<1x512xf32>
    %245 = arith.select %240, %244, %238 : vector<1x512xi1>, vector<1x512xf32>
    %246 = vector.extract_strided_slice %229 {offsets = [0, 0], sizes = [4, 512], strides = [1, 1]} : vector<8x512xf32> to vector<4x512xf32>
    %cst_69 = arith.constant dense<0.000000e+00> : vector<512xf32>
    %247 = vector.multi_reduction <add>, %246, %cst_69 [0] : vector<4x512xf32> to vector<512xf32>
    %248 = vector.shape_cast %247 : vector<512xf32> to vector<1x512xf32>
    %249 = vector.extract_strided_slice %218 {offsets = [0, 0], sizes = [4, 512], strides = [1, 1]} : vector<8x512xf32> to vector<4x512xf32>
    %cst_70 = arith.constant dense<0xFF800000> : vector<512xf32>
    %250 = vector.multi_reduction <maximumf>, %249, %cst_70 [0] : vector<4x512xf32> to vector<512xf32>
    %251 = vector.shape_cast %250 : vector<512xf32> to vector<1x512xf32>
    %252 = vector.broadcast %cst : f32 to vector<1x512xf32>
    %253 = arith.cmpf ogt, %248, %252 : vector<1x512xf32>
    %254 = vector.broadcast %cst_1 : f32 to vector<1x512xf32>
    %255 = arith.maximumf %248, %254 : vector<1x512xf32>
    %256 = math.log %255 : vector<1x512xf32>
    %257 = arith.addf %226, %256 : vector<1x512xf32>
    %258 = arith.select %253, %257, %251 : vector<1x512xi1>, vector<1x512xf32>
    %c255_i32_71 = arith.constant 255 : i32
    %259 = vector.broadcast %c255_i32_71 : i32 to vector<1x512xi32>
    %260 = arith.cmpi ne, %221, %259 : vector<1x512xi32>
    %261 = arith.addi %5, %215 : i32
    %262 = vector.broadcast %261 : i32 to vector<1x512xi32>
    %263 = arith.addi %262, %4 : vector<1x512xi32>
    %c1600_i32_72 = arith.constant 1600 : i32
    %264 = vector.broadcast %c1600_i32_72 : i32 to vector<1x512xi32>
    %265 = arith.cmpi slt, %263, %264 : vector<1x512xi32>
    %266 = arith.andi %260, %265 : vector<1x512xi1>
    %c255_i32_73 = arith.constant 255 : i32
    %267 = vector.broadcast %c255_i32_73 : i32 to vector<1x512xi32>
    %268 = arith.cmpi eq, %221, %267 : vector<1x512xi32>
    %c0_i32_74 = arith.constant 0 : i32
    %269 = vector.broadcast %c0_i32_74 : i32 to vector<1x512xi32>
    %270 = arith.select %268, %269, %221 : vector<1x512xi1>, vector<1x512xi32>
    %cst_75 = arith.constant dense<0xFF800000> : vector<512xf32>
    %271 = vector.multi_reduction <maximumf>, %224, %cst_75 [0] : vector<2x512xf32> to vector<512xf32>
    %272 = vector.shape_cast %271 : vector<512xf32> to vector<1x512xf32>
    %273 = vector.broadcast %cst_2 : f32 to vector<1x512xf32>
    %274 = arith.cmpf ogt, %272, %273 : vector<1x512xf32>
    %275 = vector.broadcast %cst_3 : f32 to vector<1x512xf32>
    %276 = arith.select %274, %275, %272 : vector<1x512xi1>, vector<1x512xf32>
    %c0_i32_76 = arith.constant 0 : i32
    %277 = vector.broadcast %c0_i32_76 : i32 to vector<1x512xi32>
    %278 = arith.cmpi eq, %270, %277 : vector<1x512xi32>
    %279 = vector.broadcast %cst_4 : f32 to vector<1x512xf32>
    %280 = arith.select %278, %276, %279 : vector<1x512xi1>, vector<1x512xf32>
    %281 = vector.broadcast %cst_3 : f32 to vector<1x512xf32>
    %282 = arith.subf %281, %280 : vector<1x512xf32>
    %283 = arith.mulf %282, %282 : vector<1x512xf32>
    %c0_i32_77 = arith.constant 0 : i32
    %284 = vector.broadcast %c0_i32_77 : i32 to vector<1x512xi32>
    %285 = arith.cmpi eq, %221, %284 : vector<1x512xi32>
    %286 = vector.extract_strided_slice %218 {offsets = [0, 0], sizes = [1, 512], strides = [1, 1]} : vector<8x512xf32> to vector<1x512xf32>
    %287 = arith.subf %286, %233 : vector<1x512xf32>
    %288 = arith.subf %245, %233 : vector<1x512xf32>
    %289 = arith.select %285, %287, %288 : vector<1x512xi1>, vector<1x512xf32>
    %cst_78 = arith.constant 0.000000e+00 : f32
    %290 = vector.broadcast %cst_78 : f32 to vector<1x512xf32>
    %291 = arith.subf %290, %289 : vector<1x512xf32>
    %292 = arith.mulf %291, %283 : vector<1x512xf32>
    %293 = vector.broadcast %cst_4 : f32 to vector<1x512xf32>
    %294 = arith.select %266, %292, %293 : vector<1x512xi1>, vector<1x512xf32>
    %c4_i32_79 = arith.constant 4 : i32
    %295 = vector.broadcast %c4_i32_79 : i32 to vector<1x512xi32>
    %296 = arith.cmpi slt, %221, %295 : vector<1x512xi32>
    %c0_i32_80 = arith.constant 0 : i32
    %297 = vector.broadcast %c0_i32_80 : i32 to vector<1x512xi32>
    %298 = arith.select %296, %297, %221 : vector<1x512xi1>, vector<1x512xi32>
    %299 = vector.broadcast %298 : vector<1x512xi32> to vector<8x512xi32>
    %300 = arith.cmpi eq, %3, %299 : vector<8x512xi32>
    %301 = vector.broadcast %cst_4 : f32 to vector<8x512xf32>
    %302 = arith.select %300, %218, %301 : vector<8x512xi1>, vector<8x512xf32>
    %cst_81 = arith.constant dense<0.000000e+00> : vector<512xf32>
    %303 = vector.multi_reduction <add>, %302, %cst_81 [0] : vector<8x512xf32> to vector<512xf32>
    %304 = vector.shape_cast %303 : vector<512xf32> to vector<1x512xf32>
    %305 = arith.subf %258, %233 : vector<1x512xf32>
    %c0_i32_82 = arith.constant 0 : i32
    %306 = vector.broadcast %c0_i32_82 : i32 to vector<1x512xi32>
    %307 = arith.cmpi eq, %298, %306 : vector<1x512xi32>
    %308 = arith.subf %304, %233 : vector<1x512xf32>
    %309 = arith.select %307, %305, %308 : vector<1x512xi1>, vector<1x512xf32>
    %cst_83 = arith.constant 0.000000e+00 : f32
    %310 = vector.broadcast %cst_83 : f32 to vector<1x512xf32>
    %311 = arith.subf %310, %309 : vector<1x512xf32>
    %312 = vector.broadcast %cst_4 : f32 to vector<1x512xf32>
    %313 = arith.select %266, %311, %312 : vector<1x512xi1>, vector<1x512xf32>
    %c0_84 = arith.constant 0 : index
    %c0_85 = arith.constant 0 : index
    %314 = vector.load %arg6[%c0_84, %c0_85] : memref<1x512xf32, #tpu.memory_space<vmem>>, vector<1x512xf32>
    %315 = arith.addf %294, %313 : vector<1x512xf32>
    %316 = arith.addf %314, %315 : vector<1x512xf32>
    %c0_86 = arith.constant 0 : index
    %c0_87 = arith.constant 0 : index
    %317 = vector.load %arg6[%c0_86, %c0_87] : memref<1x512xf32, #tpu.memory_space<vmem>>, vector<1x512xf32>
    tpu.vector_store %arg6[%c0_86, %c0_87], %316 {strides = array<i32>} : memref<1x512xf32, #tpu.memory_space<vmem>>, vector<1x512xf32>,
    %c3_i32 = arith.constant 3 : i32
    %c1_i32_88 = arith.constant 1 : i32
    %318 = arith.cmpi eq, %arg1, %c1_i32_88 : i32
    %319 = arith.extui %318 : i1 to i32
    %c0_i32_89 = arith.constant 0 : i32
    %320 = arith.cmpi ne, %319, %c0_i32_89 : i32
    scf.if %320 {
      %c0_90 = arith.constant 0 : index
      %c0_91 = arith.constant 0 : index
      %321 = vector.load %arg6[%c0_90, %c0_91] : memref<1x512xf32, #tpu.memory_space<vmem>>, vector<1x512xf32>
      %c0_92 = arith.constant 0 : index
      %c0_93 = arith.constant 0 : index
      %c0_94 = arith.constant 0 : index
      %322 = vector.load %arg5[%c0_92, %c0_93, %c0_94] : memref<1x1x512xf32, #tpu.memory_space<vmem>>, vector<1x1x512xf32>
      %323 = vector.shape_cast %322 : vector<1x1x512xf32> to vector<1x512xf32>
      %324 = vector.shape_cast %321 : vector<1x512xf32> to vector<1x1x512xf32>
      tpu.vector_store %arg5[%c0_92, %c0_93, %c0_94], %324 {strides = array<i32>} : memref<1x1x512xf32, #tpu.memory_space<vmem>>, vector<1x1x512xf32>,
    } else {
    }
    return
  }
  func.func @transform_0(%arg0: i32, %arg1: i32) -> (i32, i32, i32) {
    %c0_i32 = arith.constant 0 : i32
    %c0_i32_0 = arith.constant 0 : i32
    return %arg0, %c0_i32, %arg1 : i32, i32, i32
  }
  func.func @transform_1(%arg0: i32, %arg1: i32) -> (i32, i32, i32) {
    %c0_i32 = arith.constant 0 : i32
    %c0_i32_0 = arith.constant 0 : i32
    return %arg0, %c0_i32, %arg1 : i32, i32, i32
  }
  func.func @transform_2(%arg0: i32, %arg1: i32) -> (i32, i32, i32) {
    %c0_i32 = arith.constant 0 : i32
    %c0_i32_0 = arith.constant 0 : i32
    return %arg0, %c0_i32, %arg1 : i32, i32, i32
  }
  func.func @transform_3(%arg0: i32, %arg1: i32) -> (i32, i32, i32) {
    %c0_i32 = arith.constant 0 : i32
    %c0_i32_0 = arith.constant 0 : i32
    %c0_i32_1 = arith.constant 0 : i32
    return %arg0, %c0_i32, %c0_i32_0 : i32, i32, i32
  }
}

</mosaic_0001>

<llo_original>
// kernel: tpu_custom_call.1
$region0: #{tpu_custom_call.1}
  #allocation0 [shape = 'u32[]', space=smem, size = 0x4, offset = 0x4, fixed_abs, tag = 'smem constant byte address 0x4 - core index']
  #allocation1 [shape = 'u32[144,128]{1,0:T(1,128)}', space=vmem, size = 0x12000, scoped, tag = 'internal scratch']
  #allocation2 [shape = 'f32[1,512]{1,0:T(1,128)}', space=vmem, size = 0x800, scoped, tag = 'scratch operand']
  %s0 = inlined_call_operand.hbm [shape: f32[2,8,1600], index: 0, kind: input, shape index: {}]
  %s1 = inlined_call_operand.hbm [shape: s32[2,1,1600], index: 1, kind: input, shape index: {}]
  %s2 = inlined_call_operand.hbm [shape: f32[2,2,1600], index: 2, kind: input, shape index: {}]
  %s3 = inlined_call_operand.hbm [shape: f32[2,1,512], index: 3, kind: output, shape index: {}]
  %s4 = sld [smem:[#allocation0]]
  $region65: #{tpu_custom_call.1} parent=0
    _
  %s6 = ssub.s32 1, %s4
  %s7 = scalar_select 0, %s6, %s4
  $region1: #{tpu_custom_call.1} parent=0
    #allocation3 [shape = 'u8[98304]{0}', space=vmem, size = 0x18000, scoped, tag = 'input window, operand 0']
    #allocation4 [shape = 's32[2]{0}', space=sflag, size = 0x8, scoped, tag = 'scoped memory for tpu_custom_call.1']
    #allocation5 [shape = 's32[2]{0}', space=sflag, size = 0x8, scoped, tag = 'scoped memory for tpu_custom_call.1']
    #allocation6 [shape = 'u8[12288]{0}', space=vmem, size = 0x3000, scoped, tag = 'input window, operand 1']
    #allocation7 [shape = 's32[2]{0}', space=sflag, size = 0x8, scoped, tag = 'scoped memory for tpu_custom_call.1']
    #allocation8 [shape = 'u8[24576]{0}', space=vmem, size = 0x6000, scoped, tag = 'input window, operand 2']
    #allocation9 [shape = 'u8[4096]{0}', space=vmem, size = 0x1000, scoped, tag = 'output window, operand 0']
    %8 = vsyncpa [#allocation4], 0
    %s9 = scalar_lea.sflag [#allocation4], 1
    %10 = vsyncpa %s9, 0
    %11 = vsyncpa [#allocation7], 0
    %s12 = scalar_lea.sflag [#allocation7], 1
    %13 = vsyncpa %s12, 0
    %14 = vsyncpa [#allocation5], 0
    %s15 = scalar_lea.sflag [#allocation5], 1
    %16 = vsyncpa %s15, 0
    loop: start=0, step=1, limit=6
    $region2: #{tpu_custom_call.1} parent=1 // loop_pre_header
      _
    $region3: #{tpu_custom_call.1} parent=1 // loop_header
      %s18 = sphi 0, %s22
      %p19 = scmp.ge.s32.totalorder %s18, 6
      %s25 = sphi 0, %s37
      %s26 = sphi 0, %s33
      %s27 = sphi 0, %s25
      %s28 = sphi 0, %s26
      %s29 = sphi 0, %s27
      %s30 = sphi 0, %s28
      %s42 = sphi 0, %s44
      %s45 = sphi 0, %s42
      %s46 = sphi 0, %s45
      %s62 = sphi 0, %s46
      %s70 = sphi 0, %s72
      %s73 = sphi 0, %s70
      %s74 = sphi 0, %s73
      %s90 = sphi 0, %s74
      %s98 = sphi 0, %s100
      %s101 = sphi 0, %s98
      %s102 = sphi 0, %s101
      %s118 = sphi 0, %s102
      %s124 = sphi 0, %s126
      %s127 = sphi 0, %s124
      %s128 = sphi 0, %s127
      %s144 = sphi 0, %s128
    $region4: #{tpu_custom_call.1} parent=1 // loop_header_branch
      %21 = sbr.rel (%p19) target = $region8
    $region5: #{tpu_custom_call.1} parent=1 // loop_body
      %s23 = ssub.s32 %s18, 1
      %s24 = ssub.s32 %s18, 2
      %s31 = sadd.s32 1, %s26
      %p32 = scmp.ge.s32.totalorder %s31, 2
      %s33 = scalar_select %p32, 0, %s31
      %s34 = sadd.s32 1, %s25
      %s35 = scalar_select %p32, %s34, %s25
      %p36 = scmp.ge.s32.totalorder %s35, 2
      %s37 = scalar_select %p36, 0, %s35
      %s38 = ssub.s32 %s25, %s37
      %s39 = ssub.s32 %s26, %s33
      %s40 = sor.u32 %s38, %s39
      %p41 = scmp.eq.s32.totalorder %s40, 0
      %s43 = sadd.s32 %s42, 1
      %s44 = scalar_select %p41, %s42, %s43
      %p47 = pneg %p41
      %p48 = scmp.eq.s32.totalorder %s18, 3
      %p49 = por %p47, %p48
      %p50 = scmp.ne.s32.totalorder %s42, %s45
      %p51 = scmp.eq.s32.totalorder %s18, 0
      %p52 = por %p50, %p51
      %p53 = scmp.ne.s32.totalorder %s42, %s45
      %p54 = scmp.eq.s32.totalorder %s23, 3
      %p55 = por %p53, %p54
      %p56 = scmp.ne.s32.totalorder %s45, %s46
      %p57 = scmp.eq.s32.totalorder %s23, 0
      %p58 = por %p56, %p57
      %p59 = scmp.ne.s32.totalorder %s45, %s46
      %p60 = scmp.eq.s32.totalorder %s24, 3
      %p61 = por %p59, %p60
      %p63 = scmp.ne.s32.totalorder %s46, %s62
      %p64 = scmp.eq.s32.totalorder %s24, 0
      %p65 = por %p63, %p64
      %s66 = ssub.s32 %s25, %s37
      %s67 = ssub.s32 %s26, %s33
      %s68 = sor.u32 %s66, %s67
      %p69 = scmp.eq.s32.totalorder %s68, 0
      %s71 = sadd.s32 %s70, 1
      %s72 = scalar_select %p69, %s70, %s71
      %p75 = pneg %p69
      %p76 = scmp.eq.s32.totalorder %s18, 3
      %p77 = por %p75, %p76
      %p78 = scmp.ne.s32.totalorder %s70, %s73
      %p79 = scmp.eq.s32.totalorder %s18, 0
      %p80 = por %p78, %p79
      %p81 = scmp.ne.s32.totalorder %s70, %s73
      %p82 = scmp.eq.s32.totalorder %s23, 3
      %p83 = por %p81, %p82
      %p84 = scmp.ne.s32.totalorder %s73, %s74
      %p85 = scmp.eq.s32.totalorder %s23, 0
      %p86 = por %p84, %p85
      %p87 = scmp.ne.s32.totalorder %s73, %s74
      %p88 = scmp.eq.s32.totalorder %s24, 3
      %p89 = por %p87, %p88
      %p91 = scmp.ne.s32.totalorder %s74, %s90
      %p92 = scmp.eq.s32.totalorder %s24, 0
      %p93 = por %p91, %p92
      %s94 = ssub.s32 %s25, %s37
      %s95 = ssub.s32 %s26, %s33
      %s96 = sor.u32 %s94, %s95
      %p97 = scmp.eq.s32.totalorder %s96, 0
      %s99 = sadd.s32 %s98, 1
      %s100 = scalar_select %p97, %s98, %s99
      %p103 = pneg %p97
      %p104 = scmp.eq.s32.totalorder %s18, 3
      %p105 = por %p103, %p104
      %p106 = scmp.ne.s32.totalorder %s98, %s101
      %p107 = scmp.eq.s32.totalorder %s18, 0
      %p108 = por %p106, %p107
      %p109 = scmp.ne.s32.totalorder %s98, %s101
      %p110 = scmp.eq.s32.totalorder %s23, 3
      %p111 = por %p109, %p110
      %p112 = scmp.ne.s32.totalorder %s101, %s102
      %p113 = scmp.eq.s32.totalorder %s23, 0
      %p114 = por %p112, %p113
      %p115 = scmp.ne.s32.totalorder %s101, %s102
      %p116 = scmp.eq.s32.totalorder %s24, 3
      %p117 = por %p115, %p116
      %p119 = scmp.ne.s32.totalorder %s102, %s118
      %p120 = scmp.eq.s32.totalorder %s24, 0
      %p121 = por %p119, %p120
      %s122 = ssub.s32 %s25, %s37
      %p123 = scmp.eq.s32.totalorder %s122, 0
      %s125 = sadd.s32 %s124, 1
      %s126 = scalar_select %p123, %s124, %s125
      %p129 = pneg %p123
      %p130 = scmp.eq.s32.totalorder %s18, 3
      %p131 = por %p129, %p130
      %p132 = scmp.ne.s32.totalorder %s124, %s127
      %p133 = scmp.eq.s32.totalorder %s18, 0
      %p134 = por %p132, %p133
      %p135 = scmp.ne.s32.totalorder %s124, %s127
      %p136 = scmp.eq.s32.totalorder %s23, 3
      %p137 = por %p135, %p136
      %p138 = scmp.ne.s32.totalorder %s127, %s128
      %p139 = scmp.eq.s32.totalorder %s23, 0
      %p140 = por %p138, %p139
      %p141 = scmp.ne.s32.totalorder %s127, %s128
      %p142 = scmp.eq.s32.totalorder %s24, 3
      %p143 = por %p141, %p142
      %p145 = scmp.ne.s32.totalorder %s128, %s144
      %p146 = scmp.eq.s32.totalorder %s24, 0
      %p147 = por %p145, %p146
      %p148 = scmp.le.s32.totalorder 1, %s18
      %p149 = scmp.lt.s32.totalorder %s18, 5
      %p150 = pnand %p148, %p149
      %p151 = pneg %p150
      // Predicated region
      $region9: #{tpu_custom_call.1} parent=5 // pred_check
        _
      $region10: #{tpu_custom_call.1} parent=5 // pred_check_branch
        %153 = sbr.rel (%p150) target = $region12
      $region11: #{tpu_custom_call.1} parent=5 // pred_region
        %s154 = ssub.s32 %s18, 1
      $region12: #{tpu_custom_call.1} parent=5 // pred_fallthru
        _
      %p155 = scmp.lt.s32.totalorder %s18, 4
      // Predicated region
      $region13: #{tpu_custom_call.1} parent=5 // pred_check
        %p156 = pneg %p155
      $region14: #{tpu_custom_call.1} parent=5 // pred_check_branch
        %158 = sbr.rel (%p156) target = $region16
      $region15: #{tpu_custom_call.1} parent=5 // pred_region
        // Predicated region
        $region17: #{tpu_custom_call.1} parent=15 // pred_check
          %p159 = pneg %p52
        $region18: #{tpu_custom_call.1} parent=15 // pred_check_branch
          %161 = sbr.rel (%p159) target = $region20
        $region19: #{tpu_custom_call.1} parent=15 // pred_region
          %s162 = sand.u32 %s42, 1
          %s163 = scalar_lea.sflag [#allocation4], %s162
          %s164 = sand.u32 %s42, 1
          %s165 = smul.addr %s164, 96
          %s166 = scalar_lea.vmem [#allocation3], %s165
          %s167 = smul.u32 12, %s26
          %s168 = ssub.s32 13, %s167
          %p169 = scmp.lt.s32.totalorder %s168, 12
          %s170 = scalar_select %p169, %s168, 12
          %s171 = smul.u32 128, %s170
          %s173 = ssub.s32 1536, %s171
          %174 = vsyncadd %s163, %s173
          %p175 = scmp.ne.s32.totalorder 0, %s171
          %s176 = smul.addr %s25, 13
          %s177 = sadd.s32 %s167, %s176
          %s178 = smul.addr %s177, 128
          %s179 = scalar_lea.hbm %s0, %s178
          %s180 = smul.u32 %s170, 8
          %s181 = sshll.u32 %s180, 4
          %s182 = sshll.u32 %s166, 4
          %s183 = int_to_ptr.vmem [resolvable:$true] %s182
          %185 = dma.hbm_to_vmem [thread:$0]  (%p175), %s179, %s181, %s183, %s163
        $region20: #{tpu_custom_call.1} parent=15 // pred_fallthru
          _
        // Predicated region
        $region21: #{tpu_custom_call.1} parent=15 // pred_check
          %p186 = pneg %p80
        $region22: #{tpu_custom_call.1} parent=15 // pred_check_branch
          %188 = sbr.rel (%p186) target = $region24
        $region23: #{tpu_custom_call.1} parent=15 // pred_region
          %s189 = sand.u32 %s18, 1
          %s190 = scalar_lea.sflag [#allocation7], %s189
          %s191 = sand.u32 %s70, 1
          %s192 = smul.addr %s191, 12
          %s193 = scalar_lea.vmem [#allocation6], %s192
          %s194 = smul.u32 12, %s26
          %s195 = ssub.s32 13, %s194
          %p196 = scmp.lt.s32.totalorder %s195, 12
          %s197 = scalar_select %p196, %s195, 12
          %s198 = smul.u32 16, %s197
          %s200 = ssub.s32 192, %s198
          %201 = vsyncadd %s190, %s200
          %p202 = scmp.ne.s32.totalorder 0, %s198
          %s203 = smul.addr %s25, 13
          %s204 = sadd.s32 %s194, %s203
          %s205 = smul.addr %s204, 16
          %s206 = scalar_lea.hbm %s1, %s205
          %s207 = sshll.u32 %s197, 4
          %s208 = sshll.u32 %s193, 4
          %s209 = int_to_ptr.vmem [resolvable:$true] %s208
          %211 = dma.hbm_to_vmem [thread:$0]  (%p202), %s206, %s207, %s209, %s190
        $region24: #{tpu_custom_call.1} parent=15 // pred_fallthru
          _
        // Predicated region
        $region25: #{tpu_custom_call.1} parent=15 // pred_check
          %p212 = pneg %p108
        $region26: #{tpu_custom_call.1} parent=15 // pred_check_branch
          %214 = sbr.rel (%p212) target = $region28
        $region27: #{tpu_custom_call.1} parent=15 // pred_region
          %s215 = sand.u32 %s18, 1
          %s216 = scalar_lea.sflag [#allocation7], %s215
          %s217 = sand.u32 %s98, 1
          %s218 = smul.addr %s217, 24
          %s219 = scalar_lea.vmem [#allocation8], %s218
          %s220 = smul.u32 12, %s26
          %s221 = ssub.s32 13, %s220
          %p222 = scmp.lt.s32.totalorder %s221, 12
          %s223 = scalar_select %p222, %s221, 12
          %s224 = smul.u32 32, %s223
          %s226 = ssub.s32 384, %s224
          %227 = vsyncadd %s216, %s226
          %p228 = scmp.ne.s32.totalorder 0, %s224
          %s229 = smul.addr %s25, 13
          %s230 = sadd.s32 %s220, %s229
          %s231 = smul.addr %s230, 32
          %s232 = scalar_lea.hbm %s2, %s231
          %s233 = smul.u32 %s223, 2
          %s234 = sshll.u32 %s233, 4
          %s235 = sshll.u32 %s219, 4
          %s236 = int_to_ptr.vmem [resolvable:$true] %s235
          %238 = dma.hbm_to_vmem [thread:$0]  (%p228), %s232, %s234, %s236, %s216
        $region28: #{tpu_custom_call.1} parent=15 // pred_fallthru
          _
      $region16: #{tpu_custom_call.1} parent=5 // pred_fallthru
        _
      %p239 = scmp.le.s32.totalorder 1, %s18
      %p240 = scmp.lt.s32.totalorder %s18, 5
      %p241 = pnand %p239, %p240
      %p242 = pneg %p241
      // Predicated region
      $region29: #{tpu_custom_call.1} parent=5 // pred_check
        _
      $region30: #{tpu_custom_call.1} parent=5 // pred_check_branch
        %244 = sbr.rel (%p241) target = $region32
      $region31: #{tpu_custom_call.1} parent=5 // pred_region
        %s245 = ssub.s32 %s18, 1
        %s246 = sand.u32 %s45, 1
        %s247 = scalar_lea.sflag [#allocation4], %s246
        %s248 = sand.u32 %s45, 1
        %s249 = smul.addr %s248, 96
        %s250 = scalar_lea.vmem [#allocation3], %s249
        // Predicated region
        $region33: #{tpu_custom_call.1} parent=31 // pred_check
          %p251 = pneg %p58
        $region34: #{tpu_custom_call.1} parent=31 // pred_check_branch
          %253 = sbr.rel (%p251) target = $region36
        $region35: #{tpu_custom_call.1} parent=31 // pred_region
          %254 = dma.done %s247, 1536
        $region36: #{tpu_custom_call.1} parent=31 // pred_fallthru
          _
        %s255 = sand.u32 %s23, 1
        %s256 = scalar_lea.sflag [#allocation7], %s255
        %s257 = sand.u32 %s73, 1
        %s258 = smul.addr %s257, 12
        %s259 = scalar_lea.vmem [#allocation6], %s258
        // Predicated region
        $region37: #{tpu_custom_call.1} parent=31 // pred_check
          %p260 = pneg %p86
        $region38: #{tpu_custom_call.1} parent=31 // pred_check_branch
          %262 = sbr.rel (%p260) target = $region40
        $region39: #{tpu_custom_call.1} parent=31 // pred_region
          %263 = dma.done %s256, 192
        $region40: #{tpu_custom_call.1} parent=31 // pred_fallthru
          _
        %s264 = sand.u32 %s23, 1
        %s265 = scalar_lea.sflag [#allocation7], %s264
        %s266 = sand.u32 %s101, 1
        %s267 = smul.addr %s266, 24
        %s268 = scalar_lea.vmem [#allocation8], %s267
        // Predicated region
        $region41: #{tpu_custom_call.1} parent=31 // pred_check
          %p269 = pneg %p114
        $region42: #{tpu_custom_call.1} parent=31 // pred_check_branch
          %271 = sbr.rel (%p269) target = $region44
        $region43: #{tpu_custom_call.1} parent=31 // pred_region
          %272 = dma.done %s265, 384
        $region44: #{tpu_custom_call.1} parent=31 // pred_fallthru
          _
        %s273 = sand.u32 %s45, 1
        %s274 = scalar_lea.sflag [#allocation4], %s273
        %s275 = sand.u32 %s45, 1
        %s276 = smul.addr %s275, 96
        %s277 = scalar_lea.vmem [#allocation3], %s276
        %p278 = pneg %p58
        %p279 = pneg %p55
        %s280 = sand.u32 %s23, 1
        %s281 = scalar_lea.sflag [#allocation7], %s280
        %s282 = sand.u32 %s73, 1
        %s283 = smul.addr %s282, 12
        %s284 = scalar_lea.vmem [#allocation6], %s283
        %p285 = pneg %p86
        %p286 = pneg %p83
        %s287 = sand.u32 %s23, 1
        %s288 = scalar_lea.sflag [#allocation7], %s287
        %s289 = sand.u32 %s101, 1
        %s290 = smul.addr %s289, 24
        %s291 = scalar_lea.vmem [#allocation8], %s290
        %p292 = pneg %p114
        %p293 = pneg %p111
        %p294 = pneg %p140
        %p295 = pneg %p137
        %s296 = sand.u32 %s127, 1
        %s297 = scalar_lea.sflag [#allocation5], %s296
        %s298 = sand.u32 %s127, 1
        %s299 = smul.addr %s298, 4
        %s300 = scalar_lea.vmem [#allocation9], %s299
        %s301 = smul.u32 12, %s28
        %s302 = ssub.s32 13, %s301
        %p303 = scmp.lt.s32.totalorder %s302, 12
        %s304 = scalar_select %p303, %s302, 12
        %s305 = smul.u32 128, %s304
        %s306 = smul.u32 12, %s28
        %s307 = ssub.s32 13, %s306
        %p308 = scmp.lt.s32.totalorder %s307, 12
        %s309 = scalar_select %p308, %s307, 12
        %s310 = smul.u32 16, %s309
        %s311 = smul.u32 12, %s28
        %s312 = ssub.s32 13, %s311
        %p313 = scmp.lt.s32.totalorder %s312, 12
        %s314 = scalar_select %p313, %s312, 12
        %s315 = smul.u32 32, %s314
        %p316 = scmp.eq.s32.totalorder %s28, 0
        // Predicated region
        $region45: #{tpu_custom_call.1} parent=31 // pred_check
          %p317 = pneg %p316
        $region46: #{tpu_custom_call.1} parent=31 // pred_check_branch
          %319 = sbr.rel (%p317) target = $region48
        $region47: #{tpu_custom_call.1} parent=31 // pred_region
          %v320 = vlaneseq
          %vm321 = vcmp.ge.s32.totalorder %v320, 0
          %vm322 = vcmp.lt.s32.totalorder %v320, 512
          %vm323 = vmand %vm321, %vm322
          %324 = vst.msk [vmem:[#allocation2] sm:$0xf] %vm323, 0.0
        $region48: #{tpu_custom_call.1} parent=31 // pred_fallthru
          _
        %v325 = vlaneseq
        %v326 = vshrl.u32 %v325, 7
        %v327 = vlaneseq
        %v328 = vand.u32 %v327, 127
        %v329 = vadd.s32 %v328, 128
        %v330 = vadd.s32 %v328, 256
        %v331 = vadd.s32 %v328, 384
        %s332 = smul.u32 %s28, 1536
        %v333 = vld [vmem:[%s250] sm:$0xff]
        %v334 = vld [vmem:[%s250 + $0x8] sm:$0xff]
        %v335 = vld [vmem:[%s250 + $0x10] sm:$0xff]
        %v336 = vld [vmem:[%s250 + $0x18] sm:$0xff]
        %v337 = vld [vmem:[%s259] sm:$0xf]
        %v338 = vld [vmem:[%s268] sm:$0xff]
        %v339 = vrot.slane %v333, 4
        %v340 = vmax.f32 %v333, %v339
        %v341 = vrot.slane %v340, 2
        %v342 = vmax.f32 %v340, %v341
        %v343 = vrot.slane %v342, 1
        %v344 = vmax.f32 %v342, %v343
        %v345 = vrot.slane %v334, 4
        %v346 = vmax.f32 %v334, %v345
        %v347 = vrot.slane %v346, 2
        %v348 = vmax.f32 %v346, %v347
        %v349 = vrot.slane %v348, 1
        %v350 = vmax.f32 %v348, %v349
        %v351 = vrot.slane %v335, 4
        %v352 = vmax.f32 %v335, %v351
        %v353 = vrot.slane %v352, 2
        %v354 = vmax.f32 %v352, %v353
        %v355 = vrot.slane %v354, 1
        %v356 = vmax.f32 %v354, %v355
        %v357 = vrot.slane %v336, 4
        %v358 = vmax.f32 %v336, %v357
        %v359 = vrot.slane %v358, 2
        %v360 = vmax.f32 %v358, %v359
        %v361 = vrot.slane %v360, 1
        %v362 = vmax.f32 %v360, %v361
        %v363 = vsub.f32 %v333, %v344
        %v364 = vsub.f32 %v334, %v350
        %v365 = vsub.f32 %v335, %v356
        %v366 = vsub.f32 %v336, %v362
        %v367 = vmul.f32 %v363, 1.442695
        %v368 = vpow.pop %v367
        %v369 = vmul.f32 %v364, 1.442695
        %v370 = vpow.pop %v369
        %v371 = vmul.f32 %v365, 1.442695
        %v372 = vpow.pop %v371
        %v373 = vmul.f32 %v366, 1.442695
        %v374 = vpow.pop %v373
        %v375 = vrot.slane %v368, 4
        %v376 = vadd.f32 %v368, %v375
        %v377 = vrot.slane %v376, 2
        %v378 = vadd.f32 %v376, %v377
        %v379 = vrot.slane %v378, 1
        %v380 = vadd.f32 %v378, %v379
        %v381 = vrot.slane %v370, 4
        %v382 = vadd.f32 %v370, %v381
        %v383 = vrot.slane %v382, 2
        %v384 = vadd.f32 %v382, %v383
        %v385 = vrot.slane %v384, 1
        %v386 = vadd.f32 %v384, %v385
        %v387 = vrot.slane %v372, 4
        %v388 = vadd.f32 %v372, %v387
        %v389 = vrot.slane %v388, 2
        %v390 = vadd.f32 %v388, %v389
        %v391 = vrot.slane %v390, 1
        %v392 = vadd.f32 %v390, %v391
        %v393 = vrot.slane %v374, 4
        %v394 = vadd.f32 %v374, %v393
        %v395 = vrot.slane %v394, 2
        %v396 = vadd.f32 %v394, %v395
        %v397 = vrot.slane %v396, 1
        %v398 = vadd.f32 %v396, %v397
        %v399 = vlog2.pop %v380
        %v400 = vmul.f32 %v399, 0.6931472
        %v401 = vlog2.pop %v386
        %v402 = vmul.f32 %v401, 0.6931472
        %v403 = vlog2.pop %v392
        %v404 = vmul.f32 %v403, 0.6931472
        %v405 = vlog2.pop %v398
        %v406 = vmul.f32 %v405, 0.6931472
        %v407 = vadd.f32 %v344, %v400
        %v408 = vadd.f32 %v350, %v402
        %v409 = vadd.f32 %v356, %v404
        %v410 = vadd.f32 %v362, %v406
        %v411 = vsub.f32 %v380, %v368
        %v412 = vsub.f32 %v386, %v370
        %v413 = vsub.f32 %v392, %v372
        %v414 = vsub.f32 %v398, %v374
        %vm415 = vcmask 1047553
        %v416 = vsel %vm415, %v333, -inf
        %v417 = vrot.slane %v416, 4
        %v418 = vmax.f32 %v416, %v417
        %v419 = vrot.slane %v418, 2
        %v420 = vmax.f32 %v418, %v419
        %v421 = vrot.slane %v420, 1
        %v422 = vmax.f32 %v420, %v421
        %v423 = vsel %vm415, %v334, -inf
        %v424 = vrot.slane %v423, 4
        %v425 = vmax.f32 %v423, %v424
        %v426 = vrot.slane %v425, 2
        %v427 = vmax.f32 %v425, %v426
        %v428 = vrot.slane %v427, 1
        %v429 = vmax.f32 %v427, %v428
        %v430 = vsel %vm415, %v335, -inf
        %v431 = vrot.slane %v430, 4
        %v432 = vmax.f32 %v430, %v431
        %v433 = vrot.slane %v432, 2
        %v434 = vmax.f32 %v432, %v433
        %v435 = vrot.slane %v434, 1
        %v436 = vmax.f32 %v434, %v435
        %v437 = vsel %vm415, %v336, -inf
        %v438 = vrot.slane %v437, 4
        %v439 = vmax.f32 %v437, %v438
        %v440 = vrot.slane %v439, 2
        %v441 = vmax.f32 %v439, %v440
        %v442 = vrot.slane %v441, 1
        %v443 = vmax.f32 %v441, %v442
        %vm444 = vcmp.gt.f32.partialorder %v411, 1e-30
        %vm445 = vcmp.gt.f32.partialorder %v412, 1e-30
        %vm446 = vcmp.gt.f32.partialorder %v413, 1e-30
        %vm447 = vcmp.gt.f32.partialorder %v414, 1e-30
        %v448 = vmax.f32 %v411, 1e-37
        %v449 = vmax.f32 %v412, 1e-37
        %v450 = vmax.f32 %v413, 1e-37
        %v451 = vmax.f32 %v414, 1e-37
        %v452 = vlog2.pop %v448
        %v453 = vmul.f32 %v452, 0.6931472
        %v454 = vlog2.pop %v449
        %v455 = vmul.f32 %v454, 0.6931472
        %v456 = vlog2.pop %v450
        %v457 = vmul.f32 %v456, 0.6931472
        %v458 = vlog2.pop %v451
        %v459 = vmul.f32 %v458, 0.6931472
        %v460 = vadd.f32 %v344, %v453
        %v461 = vadd.f32 %v350, %v455
        %v462 = vadd.f32 %v356, %v457
        %v463 = vadd.f32 %v362, %v459
        %v464 = vsel %vm444, %v460, %v422
        %v465 = vsel %vm445, %v461, %v429
        %v466 = vsel %vm446, %v462, %v436
        %v467 = vsel %vm447, %v463, %v443
        %vm468 = vcmask 1043456
        %v469 = vsel %vm468, %v368, 0.0
        %v470 = vrot.slane %v469, 4
        %v471 = vadd.f32 %v469, %v470
        %v472 = vrot.slane %v471, 2
        %v473 = vadd.f32 %v471, %v472
        %v474 = vrot.slane %v473, 1
        %v475 = vadd.f32 %v473, %v474
        %v476 = vsel %vm468, %v370, 0.0
        %v477 = vrot.slane %v476, 4
        %v478 = vadd.f32 %v476, %v477
        %v479 = vrot.slane %v478, 2
        %v480 = vadd.f32 %v478, %v479
        %v481 = vrot.slane %v480, 1
        %v482 = vadd.f32 %v480, %v481
        %v483 = vsel %vm468, %v372, 0.0
        %v484 = vrot.slane %v483, 4
        %v485 = vadd.f32 %v483, %v484
        %v486 = vrot.slane %v485, 2
        %v487 = vadd.f32 %v485, %v486
        %v488 = vrot.slane %v487, 1
        %v489 = vadd.f32 %v487, %v488
        %v490 = vsel %vm468, %v374, 0.0
        %v491 = vrot.slane %v490, 4
        %v492 = vadd.f32 %v490, %v491
        %v493 = vrot.slane %v492, 2
        %v494 = vadd.f32 %v492, %v493
        %v495 = vrot.slane %v494, 1
        %v496 = vadd.f32 %v494, %v495
        %v497 = vsel %vm468, %v333, -inf
        %v498 = vrot.slane %v497, 4
        %v499 = vmax.f32 %v497, %v498
        %v500 = vrot.slane %v499, 2
        %v501 = vmax.f32 %v499, %v500
        %v502 = vrot.slane %v501, 1
        %v503 = vmax.f32 %v501, %v502
        %v504 = vsel %vm468, %v334, -inf
        %v505 = vrot.slane %v504, 4
        %v506 = vmax.f32 %v504, %v505
        %v507 = vrot.slane %v506, 2
        %v508 = vmax.f32 %v506, %v507
        %v509 = vrot.slane %v508, 1
        %v510 = vmax.f32 %v508, %v509
        %v511 = vsel %vm468, %v335, -inf
        %v512 = vrot.slane %v511, 4
        %v513 = vmax.f32 %v511, %v512
        %v514 = vrot.slane %v513, 2
        %v515 = vmax.f32 %v513, %v514
        %v516 = vrot.slane %v515, 1
        %v517 = vmax.f32 %v515, %v516
        %v518 = vsel %vm468, %v336, -inf
        %v519 = vrot.slane %v518, 4
        %v520 = vmax.f32 %v518, %v519
        %v521 = vrot.slane %v520, 2
        %v522 = vmax.f32 %v520, %v521
        %v523 = vrot.slane %v522, 1
        %v524 = vmax.f32 %v522, %v523
        %vm525 = vcmp.gt.f32.partialorder %v475, 1e-30
        %vm526 = vcmp.gt.f32.partialorder %v482, 1e-30
        %vm527 = vcmp.gt.f32.partialorder %v489, 1e-30
        %vm528 = vcmp.gt.f32.partialorder %v496, 1e-30
        %v529 = vmax.f32 %v475, 1e-37
        %v530 = vmax.f32 %v482, 1e-37
        %v531 = vmax.f32 %v489, 1e-37
        %v532 = vmax.f32 %v496, 1e-37
        %v533 = vlog2.pop %v529
        %v534 = vmul.f32 %v533, 0.6931472
        %v535 = vlog2.pop %v530
        %v536 = vmul.f32 %v535, 0.6931472
        %v537 = vlog2.pop %v531
        %v538 = vmul.f32 %v537, 0.6931472
        %v539 = vlog2.pop %v532
        %v540 = vmul.f32 %v539, 0.6931472
        %v541 = vadd.f32 %v344, %v534
        %v542 = vadd.f32 %v350, %v536
        %v543 = vadd.f32 %v356, %v538
        %v544 = vadd.f32 %v362, %v540
        %v545 = vsel %vm525, %v541, %v503
        %v546 = vsel %vm526, %v542, %v510
        %v547 = vsel %vm527, %v543, %v517
        %v548 = vsel %vm528, %v544, %v524
        %vm549 = vcmp.ne.s32.totalorder %v337, 255
        %s550 = sadd.s32 %s332, 0
        %v551 = vstv %s550
        %v552 = vadd.s32 %v551, %v328
        %v553 = vadd.s32 %v551, %v329
        %v554 = vadd.s32 %v551, %v330
        %v555 = vadd.s32 %v551, %v331
        %vm556 = vcmp.lt.s32.totalorder %v552, 1600
        %vm557 = vcmp.lt.s32.totalorder %v553, 1600
        %vm558 = vcmp.lt.s32.totalorder %v554, 1600
        %vm559 = vcmp.lt.s32.totalorder %v555, 1600
        %v560 = vsel %vm556, 1, 0
        %v561 = vsel %vm557, 1, 0
        %v562 = vsel %vm558, 1, 0
        %v563 = vsel %vm559, 1, 0
        %v564 = vcombine.low %v560, %v561
        %v565 = vcombine.low %v562, %v563
        %v567 = vunpack.c.l.s4 1966171168
        %v568 = vunpack.c.0.s8 %v567
        %v569 = vlaneseq
        %v570 = vshrl.u32 %v569, 7
        %v571 = vsub.s32 %v568, %v570
        %v572 = vrot.slane %v564, %v571
        %v574 = vunpack.c.l.s4 1966171168
        %v575 = vunpack.c.0.s8 %v574
        %v576 = vlaneseq
        %v577 = vshrl.u32 %v576, 7
        %v578 = vsub.s32 %v575, %v577
        %v579 = vrot.slane %v565, %v578
        %v580 = vcombine.low %v572, %v579
        %v582 = vunpack.c.l.s4 1966171168
        %v583 = vunpack.c.0.s8 %v582
        %v584 = vlaneseq
        %v585 = vshrl.u32 %v584, 7
        %v586 = vsub.s32 %v583, %v585
        %v587 = vrot.slane %v580, %v586
        %vm588 = vcmp.ne.s32.totalorder %v587, 0
        %vm589 = vmand %vm549, %vm588
        %vm590 = vcmp.eq.s32.totalorder %v337, 255
        %v591 = vsel %vm590, 0, %v337
        %v593 = vcombine.high %v338, %v338
        %v595 = vunpack.c.l.s4 1983009808
        %v596 = vunpack.c.0.s8 %v595
        %v597 = vlaneseq
        %v598 = vshrl.u32 %v597, 7
        %v599 = vsub.s32 %v596, %v598
        %v600 = vrot.slane %v338, %v599
        %v602 = vunpack.c.l.s4 1983009808
        %v603 = vunpack.c.0.s8 %v602
        %v604 = vlaneseq
        %v605 = vshrl.u32 %v604, 7
        %v606 = vsub.s32 %v603, %v605
        %v607 = vrot.slane %v593, %v606
        %v608 = vcombine.high %v600, %v600
        %v609 = vcombine.high %v607, %v607
        %vm614 = vcmask 1041408
        %v615 = vsel %vm614, %v600, -inf
        %v616 = vrot.slane %v615, 4
        %v617 = vmax.f32 %v615, %v616
        %v618 = vrot.slane %v617, 2
        %v619 = vmax.f32 %v617, %v618
        %v620 = vrot.slane %v619, 1
        %v621 = vmax.f32 %v619, %v620
        %v622 = vsel %vm614, %v608, -inf
        %v623 = vrot.slane %v622, 4
        %v624 = vmax.f32 %v622, %v623
        %v625 = vrot.slane %v624, 2
        %v626 = vmax.f32 %v624, %v625
        %v627 = vrot.slane %v626, 1
        %v628 = vmax.f32 %v626, %v627
        %v629 = vsel %vm614, %v607, -inf
        %v630 = vrot.slane %v629, 4
        %v631 = vmax.f32 %v629, %v630
        %v632 = vrot.slane %v631, 2
        %v633 = vmax.f32 %v631, %v632
        %v634 = vrot.slane %v633, 1
        %v635 = vmax.f32 %v633, %v634
        %v636 = vsel %vm614, %v609, -inf
        %v637 = vrot.slane %v636, 4
        %v638 = vmax.f32 %v636, %v637
        %v639 = vrot.slane %v638, 2
        %v640 = vmax.f32 %v638, %v639
        %v641 = vrot.slane %v640, 1
        %v642 = vmax.f32 %v640, %v641
        %vm643 = vcmp.gt.f32.partialorder %v621, 0.5
        %vm644 = vcmp.gt.f32.partialorder %v628, 0.5
        %vm645 = vcmp.gt.f32.partialorder %v635, 0.5
        %vm646 = vcmp.gt.f32.partialorder %v642, 0.5
        %v647 = vsel %vm643, 1.0, %v621
        %v648 = vsel %vm644, 1.0, %v628
        %v649 = vsel %vm645, 1.0, %v635
        %v650 = vsel %vm646, 1.0, %v642
        %vm651 = vcmp.eq.s32.totalorder %v591, 0
        %v656 = vcombine.low %v647, %v648
        %v657 = vcombine.low %v649, %v650
        %v659 = vunpack.c.l.s4 1966171168
        %v660 = vunpack.c.0.s8 %v659
        %v661 = vlaneseq
        %v662 = vshrl.u32 %v661, 7
        %v663 = vsub.s32 %v660, %v662
        %v664 = vrot.slane %v656, %v663
        %v666 = vunpack.c.l.s4 1966171168
        %v667 = vunpack.c.0.s8 %v666
        %v668 = vlaneseq
        %v669 = vshrl.u32 %v668, 7
        %v670 = vsub.s32 %v667, %v669
        %v671 = vrot.slane %v657, %v670
        %v672 = vcombine.low %v664, %v671
        %v674 = vunpack.c.l.s4 1966171168
        %v675 = vunpack.c.0.s8 %v674
        %v676 = vlaneseq
        %v677 = vshrl.u32 %v676, 7
        %v678 = vsub.s32 %v675, %v677
        %v679 = vrot.slane %v672, %v678
        %v681 = vsel %vm651, %v679, 0.0
        %v682 = vsub.f32 1.0, %v681
        %v683 = vmul.f32 %v682, %v682
        %vm684 = vcmp.eq.s32.totalorder %v337, 0
        %v685 = vsub.f32 %v333, %v407
        %v686 = vsub.f32 %v334, %v408
        %v687 = vsub.f32 %v335, %v409
        %v688 = vsub.f32 %v336, %v410
        %v689 = vsub.f32 %v464, %v407
        %v690 = vsub.f32 %v465, %v408
        %v691 = vsub.f32 %v466, %v409
        %v692 = vsub.f32 %v467, %v410
        %v697 = vcombine.low %v685, %v686
        %v698 = vcombine.low %v687, %v688
        %v700 = vunpack.c.l.s4 1966171168
        %v701 = vunpack.c.0.s8 %v700
        %v702 = vlaneseq
        %v703 = vshrl.u32 %v702, 7
        %v704 = vsub.s32 %v701, %v703
        %v705 = vrot.slane %v697, %v704
        %v707 = vunpack.c.l.s4 1966171168
        %v708 = vunpack.c.0.s8 %v707
        %v709 = vlaneseq
        %v710 = vshrl.u32 %v709, 7
        %v711 = vsub.s32 %v708, %v710
        %v712 = vrot.slane %v698, %v711
        %v713 = vcombine.low %v705, %v712
        %v715 = vunpack.c.l.s4 1966171168
        %v716 = vunpack.c.0.s8 %v715
        %v717 = vlaneseq
        %v718 = vshrl.u32 %v717, 7
        %v719 = vsub.s32 %v716, %v718
        %v720 = vrot.slane %v713, %v719
        %v726 = vcombine.low %v689, %v690
        %v727 = vcombine.low %v691, %v692
        %v729 = vunpack.c.l.s4 1966171168
        %v730 = vunpack.c.0.s8 %v729
        %v731 = vlaneseq
        %v732 = vshrl.u32 %v731, 7
        %v733 = vsub.s32 %v730, %v732
        %v734 = vrot.slane %v726, %v733
        %v736 = vunpack.c.l.s4 1966171168
        %v737 = vunpack.c.0.s8 %v736
        %v738 = vlaneseq
        %v739 = vshrl.u32 %v738, 7
        %v740 = vsub.s32 %v737, %v739
        %v741 = vrot.slane %v727, %v740
        %v742 = vcombine.low %v734, %v741
        %v744 = vunpack.c.l.s4 1966171168
        %v745 = vunpack.c.0.s8 %v744
        %v746 = vlaneseq
        %v747 = vshrl.u32 %v746, 7
        %v748 = vsub.s32 %v745, %v747
        %v749 = vrot.slane %v742, %v748
        %v751 = vsel %vm684, %v720, %v749
        %v752 = vsub.f32 0.0, %v751
        %v753 = vmul.f32 %v752, %v683
        %v754 = vsel %vm589, %v753, 0.0
        %vm755 = vcmp.lt.s32.totalorder %v337, 4
        %v756 = vsel %vm755, 0, %v337
        %v757 = vlaneseq
        %v758 = vshrl.u32 %v757, 7
        %v759 = vsub.s32 0, %v758
        %v760 = vrot.slane %v756, %v759
        %v761 = vlaneseq
        %v762 = vshrl.u32 %v761, 7
        %v763 = vsub.s32 1, %v762
        %v764 = vrot.slane %v756, %v763
        %v765 = vlaneseq
        %v766 = vshrl.u32 %v765, 7
        %v767 = vsub.s32 2, %v766
        %v768 = vrot.slane %v756, %v767
        %v769 = vlaneseq
        %v770 = vshrl.u32 %v769, 7
        %v771 = vsub.s32 3, %v770
        %v772 = vrot.slane %v756, %v771
        %vm773 = vcmp.eq.s32.totalorder %v326, %v760
        %vm774 = vcmp.eq.s32.totalorder %v326, %v764
        %vm775 = vcmp.eq.s32.totalorder %v326, %v768
        %vm776 = vcmp.eq.s32.totalorder %v326, %v772
        %v777 = vsel %vm773, %v333, 0.0
        %v778 = vsel %vm774, %v334, 0.0
        %v779 = vsel %vm775, %v335, 0.0
        %v780 = vsel %vm776, %v336, 0.0
        %v781 = vrot.slane %v777, 4
        %v782 = vadd.f32 %v777, %v781
        %v783 = vrot.slane %v782, 2
        %v784 = vadd.f32 %v782, %v783
        %v785 = vrot.slane %v784, 1
        %v786 = vadd.f32 %v784, %v785
        %v787 = vrot.slane %v778, 4
        %v788 = vadd.f32 %v778, %v787
        %v789 = vrot.slane %v788, 2
        %v790 = vadd.f32 %v788, %v789
        %v791 = vrot.slane %v790, 1
        %v792 = vadd.f32 %v790, %v791
        %v793 = vrot.slane %v779, 4
        %v794 = vadd.f32 %v779, %v793
        %v795 = vrot.slane %v794, 2
        %v796 = vadd.f32 %v794, %v795
        %v797 = vrot.slane %v796, 1
        %v798 = vadd.f32 %v796, %v797
        %v799 = vrot.slane %v780, 4
        %v800 = vadd.f32 %v780, %v799
        %v801 = vrot.slane %v800, 2
        %v802 = vadd.f32 %v800, %v801
        %v803 = vrot.slane %v802, 1
        %v804 = vadd.f32 %v802, %v803
        %v805 = vsub.f32 %v545, %v407
        %v806 = vsub.f32 %v546, %v408
        %v807 = vsub.f32 %v547, %v409
        %v808 = vsub.f32 %v548, %v410
        %vm809 = vcmp.eq.s32.totalorder %v756, 0
        %v810 = vsub.f32 %v786, %v407
        %v811 = vsub.f32 %v792, %v408
        %v812 = vsub.f32 %v798, %v409
        %v813 = vsub.f32 %v804, %v410
        %v818 = vcombine.low %v805, %v806
        %v819 = vcombine.low %v807, %v808
        %v821 = vunpack.c.l.s4 1966171168
        %v822 = vunpack.c.0.s8 %v821
        %v823 = vlaneseq
        %v824 = vshrl.u32 %v823, 7
        %v825 = vsub.s32 %v822, %v824
        %v826 = vrot.slane %v818, %v825
        %v828 = vunpack.c.l.s4 1966171168
        %v829 = vunpack.c.0.s8 %v828
        %v830 = vlaneseq
        %v831 = vshrl.u32 %v830, 7
        %v832 = vsub.s32 %v829, %v831
        %v833 = vrot.slane %v819, %v832
        %v834 = vcombine.low %v826, %v833
        %v836 = vunpack.c.l.s4 1966171168
        %v837 = vunpack.c.0.s8 %v836
        %v838 = vlaneseq
        %v839 = vshrl.u32 %v838, 7
        %v840 = vsub.s32 %v837, %v839
        %v841 = vrot.slane %v834, %v840
        %v847 = vcombine.low %v810, %v811
        %v848 = vcombine.low %v812, %v813
        %v850 = vunpack.c.l.s4 1966171168
        %v851 = vunpack.c.0.s8 %v850
        %v852 = vlaneseq
        %v853 = vshrl.u32 %v852, 7
        %v854 = vsub.s32 %v851, %v853
        %v855 = vrot.slane %v847, %v854
        %v857 = vunpack.c.l.s4 1966171168
        %v858 = vunpack.c.0.s8 %v857
        %v859 = vlaneseq
        %v860 = vshrl.u32 %v859, 7
        %v861 = vsub.s32 %v858, %v860
        %v862 = vrot.slane %v848, %v861
        %v863 = vcombine.low %v855, %v862
        %v865 = vunpack.c.l.s4 1966171168
        %v866 = vunpack.c.0.s8 %v865
        %v867 = vlaneseq
        %v868 = vshrl.u32 %v867, 7
        %v869 = vsub.s32 %v866, %v868
        %v870 = vrot.slane %v863, %v869
        %v872 = vsel %vm809, %v841, %v870
        %v873 = vsub.f32 0.0, %v872
        %v874 = vsel %vm589, %v873, 0.0
        %v875 = vld [vmem:[#allocation2] sm:$0xf]
        %v876 = vadd.f32 %v754, %v874
        %v877 = vadd.f32 %v875, %v876
        %v878 = vlaneseq
        %vm879 = vcmp.ge.s32.totalorder %v878, 0
        %vm880 = vcmp.lt.s32.totalorder %v878, 512
        %vm881 = vmand %vm879, %vm880
        %882 = vst.msk [vmem:[#allocation2] sm:$0xf] %vm881, %v877
        %s883 = scalar_lea.vmem %s250, 32 [#allocation3]
        %v884 = vld [vmem:[%s883] sm:$0xff]
        %v885 = vld [vmem:[%s883 + $0x8] sm:$0xff]
        %v886 = vld [vmem:[%s883 + $0x10] sm:$0xff]
        %v887 = vld [vmem:[%s883 + $0x18] sm:$0xff]
        %s888 = scalar_lea.vmem %s259, 4 [#allocation6]
        %v889 = vld [vmem:[%s888] sm:$0xf]
        %s890 = scalar_lea.vmem %s268, 8 [#allocation8]
        %v891 = vld [vmem:[%s890] sm:$0xff]
        %v892 = vrot.slane %v884, 4
        %v893 = vmax.f32 %v884, %v892
        %v894 = vrot.slane %v893, 2
        %v895 = vmax.f32 %v893, %v894
        %v896 = vrot.slane %v895, 1
        %v897 = vmax.f32 %v895, %v896
        %v898 = vrot.slane %v885, 4
        %v899 = vmax.f32 %v885, %v898
        %v900 = vrot.slane %v899, 2
        %v901 = vmax.f32 %v899, %v900
        %v902 = vrot.slane %v901, 1
        %v903 = vmax.f32 %v901, %v902
        %v904 = vrot.slane %v886, 4
        %v905 = vmax.f32 %v886, %v904
        %v906 = vrot.slane %v905, 2
        %v907 = vmax.f32 %v905, %v906
        %v908 = vrot.slane %v907, 1
        %v909 = vmax.f32 %v907, %v908
        %v910 = vrot.slane %v887, 4
        %v911 = vmax.f32 %v887, %v910
        %v912 = vrot.slane %v911, 2
        %v913 = vmax.f32 %v911, %v912
        %v914 = vrot.slane %v913, 1
        %v915 = vmax.f32 %v913, %v914
        %v916 = vsub.f32 %v884, %v897
        %v917 = vsub.f32 %v885, %v903
        %v918 = vsub.f32 %v886, %v909
        %v919 = vsub.f32 %v887, %v915
        %v920 = vmul.f32 %v916, 1.442695
        %v921 = vpow.pop %v920
        %v922 = vmul.f32 %v917, 1.442695
        %v923 = vpow.pop %v922
        %v924 = vmul.f32 %v918, 1.442695
        %v925 = vpow.pop %v924
        %v926 = vmul.f32 %v919, 1.442695
        %v927 = vpow.pop %v926
        %v928 = vrot.slane %v921, 4
        %v929 = vadd.f32 %v921, %v928
        %v930 = vrot.slane %v929, 2
        %v931 = vadd.f32 %v929, %v930
        %v932 = vrot.slane %v931, 1
        %v933 = vadd.f32 %v931, %v932
        %v934 = vrot.slane %v923, 4
        %v935 = vadd.f32 %v923, %v934
        %v936 = vrot.slane %v935, 2
        %v937 = vadd.f32 %v935, %v936
        %v938 = vrot.slane %v937, 1
        %v939 = vadd.f32 %v937, %v938
        %v940 = vrot.slane %v925, 4
        %v941 = vadd.f32 %v925, %v940
        %v942 = vrot.slane %v941, 2
        %v943 = vadd.f32 %v941, %v942
        %v944 = vrot.slane %v943, 1
        %v945 = vadd.f32 %v943, %v944
        %v946 = vrot.slane %v927, 4
        %v947 = vadd.f32 %v927, %v946
        %v948 = vrot.slane %v947, 2
        %v949 = vadd.f32 %v947, %v948
        %v950 = vrot.slane %v949, 1
        %v951 = vadd.f32 %v949, %v950
        %v952 = vlog2.pop %v933
        %v953 = vmul.f32 %v952, 0.6931472
        %v954 = vlog2.pop %v939
        %v955 = vmul.f32 %v954, 0.6931472
        %v956 = vlog2.pop %v945
        %v957 = vmul.f32 %v956, 0.6931472
        %v958 = vlog2.pop %v951
        %v959 = vmul.f32 %v958, 0.6931472
        %v960 = vadd.f32 %v897, %v953
        %v961 = vadd.f32 %v903, %v955
        %v962 = vadd.f32 %v909, %v957
        %v963 = vadd.f32 %v915, %v959
        %v964 = vsub.f32 %v933, %v921
        %v965 = vsub.f32 %v939, %v923
        %v966 = vsub.f32 %v945, %v925
        %v967 = vsub.f32 %v951, %v927
        %v968 = vsel %vm415, %v884, -inf
        %v969 = vrot.slane %v968, 4
        %v970 = vmax.f32 %v968, %v969
        %v971 = vrot.slane %v970, 2
        %v972 = vmax.f32 %v970, %v971
        %v973 = vrot.slane %v972, 1
        %v974 = vmax.f32 %v972, %v973
        %v975 = vsel %vm415, %v885, -inf
        %v976 = vrot.slane %v975, 4
        %v977 = vmax.f32 %v975, %v976
        %v978 = vrot.slane %v977, 2
        %v979 = vmax.f32 %v977, %v978
        %v980 = vrot.slane %v979, 1
        %v981 = vmax.f32 %v979, %v980
        %v982 = vsel %vm415, %v886, -inf
        %v983 = vrot.slane %v982, 4
        %v984 = vmax.f32 %v982, %v983
        %v985 = vrot.slane %v984, 2
        %v986 = vmax.f32 %v984, %v985
        %v987 = vrot.slane %v986, 1
        %v988 = vmax.f32 %v986, %v987
        %v989 = vsel %vm415, %v887, -inf
        %v990 = vrot.slane %v989, 4
        %v991 = vmax.f32 %v989, %v990
        %v992 = vrot.slane %v991, 2
        %v993 = vmax.f32 %v991, %v992
        %v994 = vrot.slane %v993, 1
        %v995 = vmax.f32 %v993, %v994
        %vm996 = vcmp.gt.f32.partialorder %v964, 1e-30
        %vm997 = vcmp.gt.f32.partialorder %v965, 1e-30
        %vm998 = vcmp.gt.f32.partialorder %v966, 1e-30
        %vm999 = vcmp.gt.f32.partialorder %v967, 1e-30
        %v1000 = vmax.f32 %v964, 1e-37
        %v1001 = vmax.f32 %v965, 1e-37
        %v1002 = vmax.f32 %v966, 1e-37
        %v1003 = vmax.f32 %v967, 1e-37
        %v1004 = vlog2.pop %v1000
        %v1005 = vmul.f32 %v1004, 0.6931472
        %v1006 = vlog2.pop %v1001
        %v1007 = vmul.f32 %v1006, 0.6931472
        %v1008 = vlog2.pop %v1002
        %v1009 = vmul.f32 %v1008, 0.6931472
        %v1010 = vlog2.pop %v1003
        %v1011 = vmul.f32 %v1010, 0.6931472
        %v1012 = vadd.f32 %v897, %v1005
        %v1013 = vadd.f32 %v903, %v1007
        %v1014 = vadd.f32 %v909, %v1009
        %v1015 = vadd.f32 %v915, %v1011
        %v1016 = vsel %vm996, %v1012, %v974
        %v1017 = vsel %vm997, %v1013, %v981
        %v1018 = vsel %vm998, %v1014, %v988
        %v1019 = vsel %vm999, %v1015, %v995
        %v1020 = vsel %vm468, %v921, 0.0
        %v1021 = vrot.slane %v1020, 4
        %v1022 = vadd.f32 %v1020, %v1021
        %v1023 = vrot.slane %v1022, 2
        %v1024 = vadd.f32 %v1022, %v1023
        %v1025 = vrot.slane %v1024, 1
        %v1026 = vadd.f32 %v1024, %v1025
        %v1027 = vsel %vm468, %v923, 0.0
        %v1028 = vrot.slane %v1027, 4
        %v1029 = vadd.f32 %v1027, %v1028
        %v1030 = vrot.slane %v1029, 2
        %v1031 = vadd.f32 %v1029, %v1030
        %v1032 = vrot.slane %v1031, 1
        %v1033 = vadd.f32 %v1031, %v1032
        %v1034 = vsel %vm468, %v925, 0.0
        %v1035 = vrot.slane %v1034, 4
        %v1036 = vadd.f32 %v1034, %v1035
        %v1037 = vrot.slane %v1036, 2
        %v1038 = vadd.f32 %v1036, %v1037
        %v1039 = vrot.slane %v1038, 1
        %v1040 = vadd.f32 %v1038, %v1039
        %v1041 = vsel %vm468, %v927, 0.0
        %v1042 = vrot.slane %v1041, 4
        %v1043 = vadd.f32 %v1041, %v1042
        %v1044 = vrot.slane %v1043, 2
        %v1045 = vadd.f32 %v1043, %v1044
        %v1046 = vrot.slane %v1045, 1
        %v1047 = vadd.f32 %v1045, %v1046
        %v1048 = vsel %vm468, %v884, -inf
        %v1049 = vrot.slane %v1048, 4
        %v1050 = vmax.f32 %v1048, %v1049
        %v1051 = vrot.slane %v1050, 2
        %v1052 = vmax.f32 %v1050, %v1051
        %v1053 = vrot.slane %v1052, 1
        %v1054 = vmax.f32 %v1052, %v1053
        %v1055 = vsel %vm468, %v885, -inf
        %v1056 = vrot.slane %v1055, 4
        %v1057 = vmax.f32 %v1055, %v1056
        %v1058 = vrot.slane %v1057, 2
        %v1059 = vmax.f32 %v1057, %v1058
        %v1060 = vrot.slane %v1059, 1
        %v1061 = vmax.f32 %v1059, %v1060
        %v1062 = vsel %vm468, %v886, -inf
        %v1063 = vrot.slane %v1062, 4
        %v1064 = vmax.f32 %v1062, %v1063
        %v1065 = vrot.slane %v1064, 2
        %v1066 = vmax.f32 %v1064, %v1065
        %v1067 = vrot.slane %v1066, 1
        %v1068 = vmax.f32 %v1066, %v1067
        %v1069 = vsel %vm468, %v887, -inf
        %v1070 = vrot.slane %v1069, 4
        %v1071 = vmax.f32 %v1069, %v1070
        %v1072 = vrot.slane %v1071, 2
        %v1073 = vmax.f32 %v1071, %v1072
        %v1074 = vrot.slane %v1073, 1
        %v1075 = vmax.f32 %v1073, %v1074
        %vm1076 = vcmp.gt.f32.partialorder %v1026, 1e-30
        %vm1077 = vcmp.gt.f32.partialorder %v1033, 1e-30
        %vm1078 = vcmp.gt.f32.partialorder %v1040, 1e-30
        %vm1079 = vcmp.gt.f32.partialorder %v1047, 1e-30
        %v1080 = vmax.f32 %v1026, 1e-37
        %v1081 = vmax.f32 %v1033, 1e-37
        %v1082 = vmax.f32 %v1040, 1e-37
        %v1083 = vmax.f32 %v1047, 1e-37
        %v1084 = vlog2.pop %v1080
        %v1085 = vmul.f32 %v1084, 0.6931472
        %v1086 = vlog2.pop %v1081
        %v1087 = vmul.f32 %v1086, 0.6931472
        %v1088 = vlog2.pop %v1082
        %v1089 = vmul.f32 %v1088, 0.6931472
        %v1090 = vlog2.pop %v1083
        %v1091 = vmul.f32 %v1090, 0.6931472
        %v1092 = vadd.f32 %v897, %v1085
        %v1093 = vadd.f32 %v903, %v1087
        %v1094 = vadd.f32 %v909, %v1089
        %v1095 = vadd.f32 %v915, %v1091
        %v1096 = vsel %vm1076, %v1092, %v1054
        %v1097 = vsel %vm1077, %v1093, %v1061
        %v1098 = vsel %vm1078, %v1094, %v1068
        %v1099 = vsel %vm1079, %v1095, %v1075
        %vm1100 = vcmp.ne.s32.totalorder %v889, 255
        %s1101 = sadd.s32 %s332, 512
        %v1102 = vstv %s1101
        %v1103 = vadd.s32 %v1102, %v328
        %v1104 = vadd.s32 %v1102, %v329
        %v1105 = vadd.s32 %v1102, %v330
        %v1106 = vadd.s32 %v1102, %v331
        %vm1107 = vcmp.lt.s32.totalorder %v1103, 1600
        %vm1108 = vcmp.lt.s32.totalorder %v1104, 1600
        %vm1109 = vcmp.lt.s32.totalorder %v1105, 1600
        %vm1110 = vcmp.lt.s32.totalorder %v1106, 1600
        %v1111 = vsel %vm1107, 1, 0
        %v1112 = vsel %vm1108, 1, 0
        %v1113 = vsel %vm1109, 1, 0
        %v1114 = vsel %vm1110, 1, 0
        %v1115 = vcombine.low %v1111, %v1112
        %v1116 = vcombine.low %v1113, %v1114
        %v1118 = vunpack.c.l.s4 1966171168
        %v1119 = vunpack.c.0.s8 %v1118
        %v1120 = vlaneseq
        %v1121 = vshrl.u32 %v1120, 7
        %v1122 = vsub.s32 %v1119, %v1121
        %v1123 = vrot.slane %v1115, %v1122
        %v1125 = vunpack.c.l.s4 1966171168
        %v1126 = vunpack.c.0.s8 %v1125
        %v1127 = vlaneseq
        %v1128 = vshrl.u32 %v1127, 7
        %v1129 = vsub.s32 %v1126, %v1128
        %v1130 = vrot.slane %v1116, %v1129
        %v1131 = vcombine.low %v1123, %v1130
        %v1133 = vunpack.c.l.s4 1966171168
        %v1134 = vunpack.c.0.s8 %v1133
        %v1135 = vlaneseq
        %v1136 = vshrl.u32 %v1135, 7
        %v1137 = vsub.s32 %v1134, %v1136
        %v1138 = vrot.slane %v1131, %v1137
        %vm1139 = vcmp.ne.s32.totalorder %v1138, 0
        %vm1140 = vmand %vm1100, %vm1139
        %vm1141 = vcmp.eq.s32.totalorder %v889, 255
        %v1142 = vsel %vm1141, 0, %v889
        %v1144 = vcombine.high %v891, %v891
        %v1146 = vunpack.c.l.s4 1983009808
        %v1147 = vunpack.c.0.s8 %v1146
        %v1148 = vlaneseq
        %v1149 = vshrl.u32 %v1148, 7
        %v1150 = vsub.s32 %v1147, %v1149
        %v1151 = vrot.slane %v891, %v1150
        %v1153 = vunpack.c.l.s4 1983009808
        %v1154 = vunpack.c.0.s8 %v1153
        %v1155 = vlaneseq
        %v1156 = vshrl.u32 %v1155, 7
        %v1157 = vsub.s32 %v1154, %v1156
        %v1158 = vrot.slane %v1144, %v1157
        %v1159 = vcombine.high %v1151, %v1151
        %v1160 = vcombine.high %v1158, %v1158
        %v1165 = vsel %vm614, %v1151, -inf
        %v1166 = vrot.slane %v1165, 4
        %v1167 = vmax.f32 %v1165, %v1166
        %v1168 = vrot.slane %v1167, 2
        %v1169 = vmax.f32 %v1167, %v1168
        %v1170 = vrot.slane %v1169, 1
        %v1171 = vmax.f32 %v1169, %v1170
        %v1172 = vsel %vm614, %v1159, -inf
        %v1173 = vrot.slane %v1172, 4
        %v1174 = vmax.f32 %v1172, %v1173
        %v1175 = vrot.slane %v1174, 2
        %v1176 = vmax.f32 %v1174, %v1175
        %v1177 = vrot.slane %v1176, 1
        %v1178 = vmax.f32 %v1176, %v1177
        %v1179 = vsel %vm614, %v1158, -inf
        %v1180 = vrot.slane %v1179, 4
        %v1181 = vmax.f32 %v1179, %v1180
        %v1182 = vrot.slane %v1181, 2
        %v1183 = vmax.f32 %v1181, %v1182
        %v1184 = vrot.slane %v1183, 1
        %v1185 = vmax.f32 %v1183, %v1184
        %v1186 = vsel %vm614, %v1160, -inf
        %v1187 = vrot.slane %v1186, 4
        %v1188 = vmax.f32 %v1186, %v1187
        %v1189 = vrot.slane %v1188, 2
        %v1190 = vmax.f32 %v1188, %v1189
        %v1191 = vrot.slane %v1190, 1
        %v1192 = vmax.f32 %v1190, %v1191
        %vm1193 = vcmp.gt.f32.partialorder %v1171, 0.5
        %vm1194 = vcmp.gt.f32.partialorder %v1178, 0.5
        %vm1195 = vcmp.gt.f32.partialorder %v1185, 0.5
        %vm1196 = vcmp.gt.f32.partialorder %v1192, 0.5
        %v1197 = vsel %vm1193, 1.0, %v1171
        %v1198 = vsel %vm1194, 1.0, %v1178
        %v1199 = vsel %vm1195, 1.0, %v1185
        %v1200 = vsel %vm1196, 1.0, %v1192
        %vm1201 = vcmp.eq.s32.totalorder %v1142, 0
        %v1206 = vcombine.low %v1197, %v1198
        %v1207 = vcombine.low %v1199, %v1200
        %v1209 = vunpack.c.l.s4 1966171168
        %v1210 = vunpack.c.0.s8 %v1209
        %v1211 = vlaneseq
        %v1212 = vshrl.u32 %v1211, 7
        %v1213 = vsub.s32 %v1210, %v1212
        %v1214 = vrot.slane %v1206, %v1213
        %v1216 = vunpack.c.l.s4 1966171168
        %v1217 = vunpack.c.0.s8 %v1216
        %v1218 = vlaneseq
        %v1219 = vshrl.u32 %v1218, 7
        %v1220 = vsub.s32 %v1217, %v1219
        %v1221 = vrot.slane %v1207, %v1220
        %v1222 = vcombine.low %v1214, %v1221
        %v1224 = vunpack.c.l.s4 1966171168
        %v1225 = vunpack.c.0.s8 %v1224
        %v1226 = vlaneseq
        %v1227 = vshrl.u32 %v1226, 7
        %v1228 = vsub.s32 %v1225, %v1227
        %v1229 = vrot.slane %v1222, %v1228
        %v1231 = vsel %vm1201, %v1229, 0.0
        %v1232 = vsub.f32 1.0, %v1231
        %v1233 = vmul.f32 %v1232, %v1232
        %vm1234 = vcmp.eq.s32.totalorder %v889, 0
        %v1235 = vsub.f32 %v884, %v960
        %v1236 = vsub.f32 %v885, %v961
        %v1237 = vsub.f32 %v886, %v962
        %v1238 = vsub.f32 %v887, %v963
        %v1239 = vsub.f32 %v1016, %v960
        %v1240 = vsub.f32 %v1017, %v961
        %v1241 = vsub.f32 %v1018, %v962
        %v1242 = vsub.f32 %v1019, %v963
        %v1247 = vcombine.low %v1235, %v1236
        %v1248 = vcombine.low %v1237, %v1238
        %v1250 = vunpack.c.l.s4 1966171168
        %v1251 = vunpack.c.0.s8 %v1250
        %v1252 = vlaneseq
        %v1253 = vshrl.u32 %v1252, 7
        %v1254 = vsub.s32 %v1251, %v1253
        %v1255 = vrot.slane %v1247, %v1254
        %v1257 = vunpack.c.l.s4 1966171168
        %v1258 = vunpack.c.0.s8 %v1257
        %v1259 = vlaneseq
        %v1260 = vshrl.u32 %v1259, 7
        %v1261 = vsub.s32 %v1258, %v1260
        %v1262 = vrot.slane %v1248, %v1261
        %v1263 = vcombine.low %v1255, %v1262
        %v1265 = vunpack.c.l.s4 1966171168
        %v1266 = vunpack.c.0.s8 %v1265
        %v1267 = vlaneseq
        %v1268 = vshrl.u32 %v1267, 7
        %v1269 = vsub.s32 %v1266, %v1268
        %v1270 = vrot.slane %v1263, %v1269
        %v1276 = vcombine.low %v1239, %v1240
        %v1277 = vcombine.low %v1241, %v1242
        %v1279 = vunpack.c.l.s4 1966171168
        %v1280 = vunpack.c.0.s8 %v1279
        %v1281 = vlaneseq
        %v1282 = vshrl.u32 %v1281, 7
        %v1283 = vsub.s32 %v1280, %v1282
        %v1284 = vrot.slane %v1276, %v1283
        %v1286 = vunpack.c.l.s4 1966171168
        %v1287 = vunpack.c.0.s8 %v1286
        %v1288 = vlaneseq
        %v1289 = vshrl.u32 %v1288, 7
        %v1290 = vsub.s32 %v1287, %v1289
        %v1291 = vrot.slane %v1277, %v1290
        %v1292 = vcombine.low %v1284, %v1291
        %v1294 = vunpack.c.l.s4 1966171168
        %v1295 = vunpack.c.0.s8 %v1294
        %v1296 = vlaneseq
        %v1297 = vshrl.u32 %v1296, 7
        %v1298 = vsub.s32 %v1295, %v1297
        %v1299 = vrot.slane %v1292, %v1298
        %v1301 = vsel %vm1234, %v1270, %v1299
        %v1302 = vsub.f32 0.0, %v1301
        %v1303 = vmul.f32 %v1302, %v1233
        %v1304 = vsel %vm1140, %v1303, 0.0
        %vm1305 = vcmp.lt.s32.totalorder %v889, 4
        %v1306 = vsel %vm1305, 0, %v889
        %v1307 = vlaneseq
        %v1308 = vshrl.u32 %v1307, 7
        %v1309 = vsub.s32 0, %v1308
        %v1310 = vrot.slane %v1306, %v1309
        %v1311 = vlaneseq
        %v1312 = vshrl.u32 %v1311, 7
        %v1313 = vsub.s32 1, %v1312
        %v1314 = vrot.slane %v1306, %v1313
        %v1315 = vlaneseq
        %v1316 = vshrl.u32 %v1315, 7
        %v1317 = vsub.s32 2, %v1316
        %v1318 = vrot.slane %v1306, %v1317
        %v1319 = vlaneseq
        %v1320 = vshrl.u32 %v1319, 7
        %v1321 = vsub.s32 3, %v1320
        %v1322 = vrot.slane %v1306, %v1321
        %vm1323 = vcmp.eq.s32.totalorder %v326, %v1310
        %vm1324 = vcmp.eq.s32.totalorder %v326, %v1314
        %vm1325 = vcmp.eq.s32.totalorder %v326, %v1318
        %vm1326 = vcmp.eq.s32.totalorder %v326, %v1322
        %v1327 = vsel %vm1323, %v884, 0.0
        %v1328 = vsel %vm1324, %v885, 0.0
        %v1329 = vsel %vm1325, %v886, 0.0
        %v1330 = vsel %vm1326, %v887, 0.0
        %v1331 = vrot.slane %v1327, 4
        %v1332 = vadd.f32 %v1327, %v1331
        %v1333 = vrot.slane %v1332, 2
        %v1334 = vadd.f32 %v1332, %v1333
        %v1335 = vrot.slane %v1334, 1
        %v1336 = vadd.f32 %v1334, %v1335
        %v1337 = vrot.slane %v1328, 4
        %v1338 = vadd.f32 %v1328, %v1337
        %v1339 = vrot.slane %v1338, 2
        %v1340 = vadd.f32 %v1338, %v1339
        %v1341 = vrot.slane %v1340, 1
        %v1342 = vadd.f32 %v1340, %v1341
        %v1343 = vrot.slane %v1329, 4
        %v1344 = vadd.f32 %v1329, %v1343
        %v1345 = vrot.slane %v1344, 2
        %v1346 = vadd.f32 %v1344, %v1345
        %v1347 = vrot.slane %v1346, 1
        %v1348 = vadd.f32 %v1346, %v1347
        %v1349 = vrot.slane %v1330, 4
        %v1350 = vadd.f32 %v1330, %v1349
        %v1351 = vrot.slane %v1350, 2
        %v1352 = vadd.f32 %v1350, %v1351
        %v1353 = vrot.slane %v1352, 1
        %v1354 = vadd.f32 %v1352, %v1353
        %v1355 = vsub.f32 %v1096, %v960
        %v1356 = vsub.f32 %v1097, %v961
        %v1357 = vsub.f32 %v1098, %v962
        %v1358 = vsub.f32 %v1099, %v963
        %vm1359 = vcmp.eq.s32.totalorder %v1306, 0
        %v1360 = vsub.f32 %v1336, %v960
        %v1361 = vsub.f32 %v1342, %v961
        %v1362 = vsub.f32 %v1348, %v962
        %v1363 = vsub.f32 %v1354, %v963
        %v1368 = vcombine.low %v1355, %v1356
        %v1369 = vcombine.low %v1357, %v1358
        %v1371 = vunpack.c.l.s4 1966171168
        %v1372 = vunpack.c.0.s8 %v1371
        %v1373 = vlaneseq
        %v1374 = vshrl.u32 %v1373, 7
        %v1375 = vsub.s32 %v1372, %v1374
        %v1376 = vrot.slane %v1368, %v1375
        %v1378 = vunpack.c.l.s4 1966171168
        %v1379 = vunpack.c.0.s8 %v1378
        %v1380 = vlaneseq
        %v1381 = vshrl.u32 %v1380, 7
        %v1382 = vsub.s32 %v1379, %v1381
        %v1383 = vrot.slane %v1369, %v1382
        %v1384 = vcombine.low %v1376, %v1383
        %v1386 = vunpack.c.l.s4 1966171168
        %v1387 = vunpack.c.0.s8 %v1386
        %v1388 = vlaneseq
        %v1389 = vshrl.u32 %v1388, 7
        %v1390 = vsub.s32 %v1387, %v1389
        %v1391 = vrot.slane %v1384, %v1390
        %v1397 = vcombine.low %v1360, %v1361
        %v1398 = vcombine.low %v1362, %v1363
        %v1400 = vunpack.c.l.s4 1966171168
        %v1401 = vunpack.c.0.s8 %v1400
        %v1402 = vlaneseq
        %v1403 = vshrl.u32 %v1402, 7
        %v1404 = vsub.s32 %v1401, %v1403
        %v1405 = vrot.slane %v1397, %v1404
        %v1407 = vunpack.c.l.s4 1966171168
        %v1408 = vunpack.c.0.s8 %v1407
        %v1409 = vlaneseq
        %v1410 = vshrl.u32 %v1409, 7
        %v1411 = vsub.s32 %v1408, %v1410
        %v1412 = vrot.slane %v1398, %v1411
        %v1413 = vcombine.low %v1405, %v1412
        %v1415 = vunpack.c.l.s4 1966171168
        %v1416 = vunpack.c.0.s8 %v1415
        %v1417 = vlaneseq
        %v1418 = vshrl.u32 %v1417, 7
        %v1419 = vsub.s32 %v1416, %v1418
        %v1420 = vrot.slane %v1413, %v1419
        %v1422 = vsel %vm1359, %v1391, %v1420
        %v1423 = vsub.f32 0.0, %v1422
        %v1424 = vsel %vm1140, %v1423, 0.0
        %v1425 = vld [vmem:[#allocation2] sm:$0xf]
        %v1426 = vadd.f32 %v1304, %v1424
        %v1427 = vadd.f32 %v1425, %v1426
        %1428 = vst.msk [vmem:[#allocation2] sm:$0xf] %vm881, %v1427
        %s1429 = scalar_lea.vmem %s250, 64 [#allocation3]
        %v1430 = vld [vmem:[%s1429] sm:$0xff]
        %v1431 = vld [vmem:[%s1429 + $0x8] sm:$0xff]
        %v1432 = vld [vmem:[%s1429 + $0x10] sm:$0xff]
        %v1433 = vld [vmem:[%s1429 + $0x18] sm:$0xff]
        %s1434 = scalar_lea.vmem %s259, 8 [#allocation6]
        %v1435 = vld [vmem:[%s1434] sm:$0xf]
        %s1436 = scalar_lea.vmem %s268, 16 [#allocation8]
        %v1437 = vld [vmem:[%s1436] sm:$0xff]
        %v1438 = vrot.slane %v1430, 4
        %v1439 = vmax.f32 %v1430, %v1438
        %v1440 = vrot.slane %v1439, 2
        %v1441 = vmax.f32 %v1439, %v1440
        %v1442 = vrot.slane %v1441, 1
        %v1443 = vmax.f32 %v1441, %v1442
        %v1444 = vrot.slane %v1431, 4
        %v1445 = vmax.f32 %v1431, %v1444
        %v1446 = vrot.slane %v1445, 2
        %v1447 = vmax.f32 %v1445, %v1446
        %v1448 = vrot.slane %v1447, 1
        %v1449 = vmax.f32 %v1447, %v1448
        %v1450 = vrot.slane %v1432, 4
        %v1451 = vmax.f32 %v1432, %v1450
        %v1452 = vrot.slane %v1451, 2
        %v1453 = vmax.f32 %v1451, %v1452
        %v1454 = vrot.slane %v1453, 1
        %v1455 = vmax.f32 %v1453, %v1454
        %v1456 = vrot.slane %v1433, 4
        %v1457 = vmax.f32 %v1433, %v1456
        %v1458 = vrot.slane %v1457, 2
        %v1459 = vmax.f32 %v1457, %v1458
        %v1460 = vrot.slane %v1459, 1
        %v1461 = vmax.f32 %v1459, %v1460
        %v1462 = vsub.f32 %v1430, %v1443
        %v1463 = vsub.f32 %v1431, %v1449
        %v1464 = vsub.f32 %v1432, %v1455
        %v1465 = vsub.f32 %v1433, %v1461
        %v1466 = vmul.f32 %v1462, 1.442695
        %v1467 = vpow.pop %v1466
        %v1468 = vmul.f32 %v1463, 1.442695
        %v1469 = vpow.pop %v1468
        %v1470 = vmul.f32 %v1464, 1.442695
        %v1471 = vpow.pop %v1470
        %v1472 = vmul.f32 %v1465, 1.442695
        %v1473 = vpow.pop %v1472
        %v1474 = vrot.slane %v1467, 4
        %v1475 = vadd.f32 %v1467, %v1474
        %v1476 = vrot.slane %v1475, 2
        %v1477 = vadd.f32 %v1475, %v1476
        %v1478 = vrot.slane %v1477, 1
        %v1479 = vadd.f32 %v1477, %v1478
        %v1480 = vrot.slane %v1469, 4
        %v1481 = vadd.f32 %v1469, %v1480
        %v1482 = vrot.slane %v1481, 2
        %v1483 = vadd.f32 %v1481, %v1482
        %v1484 = vrot.slane %v1483, 1
        %v1485 = vadd.f32 %v1483, %v1484
        %v1486 = vrot.slane %v1471, 4
        %v1487 = vadd.f32 %v1471, %v1486
        %v1488 = vrot.slane %v1487, 2
        %v1489 = vadd.f32 %v1487, %v1488
        %v1490 = vrot.slane %v1489, 1
        %v1491 = vadd.f32 %v1489, %v1490
        %v1492 = vrot.slane %v1473, 4
        %v1493 = vadd.f32 %v1473, %v1492
        %v1494 = vrot.slane %v1493, 2
        %v1495 = vadd.f32 %v1493, %v1494
        %v1496 = vrot.slane %v1495, 1
        %v1497 = vadd.f32 %v1495, %v1496
        %v1498 = vlog2.pop %v1479
        %v1499 = vmul.f32 %v1498, 0.6931472
        %v1500 = vlog2.pop %v1485
        %v1501 = vmul.f32 %v1500, 0.6931472
        %v1502 = vlog2.pop %v1491
        %v1503 = vmul.f32 %v1502, 0.6931472
        %v1504 = vlog2.pop %v1497
        %v1505 = vmul.f32 %v1504, 0.6931472
        %v1506 = vadd.f32 %v1443, %v1499
        %v1507 = vadd.f32 %v1449, %v1501
        %v1508 = vadd.f32 %v1455, %v1503
        %v1509 = vadd.f32 %v1461, %v1505
        %v1510 = vsub.f32 %v1479, %v1467
        %v1511 = vsub.f32 %v1485, %v1469
        %v1512 = vsub.f32 %v1491, %v1471
        %v1513 = vsub.f32 %v1497, %v1473
        %v1514 = vsel %vm415, %v1430, -inf
        %v1515 = vrot.slane %v1514, 4
        %v1516 = vmax.f32 %v1514, %v1515
        %v1517 = vrot.slane %v1516, 2
        %v1518 = vmax.f32 %v1516, %v1517
        %v1519 = vrot.slane %v1518, 1
        %v1520 = vmax.f32 %v1518, %v1519
        %v1521 = vsel %vm415, %v1431, -inf
        %v1522 = vrot.slane %v1521, 4
        %v1523 = vmax.f32 %v1521, %v1522
        %v1524 = vrot.slane %v1523, 2
        %v1525 = vmax.f32 %v1523, %v1524
        %v1526 = vrot.slane %v1525, 1
        %v1527 = vmax.f32 %v1525, %v1526
        %v1528 = vsel %vm415, %v1432, -inf
        %v1529 = vrot.slane %v1528, 4
        %v1530 = vmax.f32 %v1528, %v1529
        %v1531 = vrot.slane %v1530, 2
        %v1532 = vmax.f32 %v1530, %v1531
        %v1533 = vrot.slane %v1532, 1
        %v1534 = vmax.f32 %v1532, %v1533
        %v1535 = vsel %vm415, %v1433, -inf
        %v1536 = vrot.slane %v1535, 4
        %v1537 = vmax.f32 %v1535, %v1536
        %v1538 = vrot.slane %v1537, 2
        %v1539 = vmax.f32 %v1537, %v1538
        %v1540 = vrot.slane %v1539, 1
        %v1541 = vmax.f32 %v1539, %v1540
        %vm1542 = vcmp.gt.f32.partialorder %v1510, 1e-30
        %vm1543 = vcmp.gt.f32.partialorder %v1511, 1e-30
        %vm1544 = vcmp.gt.f32.partialorder %v1512, 1e-30
        %vm1545 = vcmp.gt.f32.partialorder %v1513, 1e-30
        %v1546 = vmax.f32 %v1510, 1e-37
        %v1547 = vmax.f32 %v1511, 1e-37
        %v1548 = vmax.f32 %v1512, 1e-37
        %v1549 = vmax.f32 %v1513, 1e-37
        %v1550 = vlog2.pop %v1546
        %v1551 = vmul.f32 %v1550, 0.6931472
        %v1552 = vlog2.pop %v1547
        %v1553 = vmul.f32 %v1552, 0.6931472
        %v1554 = vlog2.pop %v1548
        %v1555 = vmul.f32 %v1554, 0.6931472
        %v1556 = vlog2.pop %v1549
        %v1557 = vmul.f32 %v1556, 0.6931472
        %v1558 = vadd.f32 %v1443, %v1551
        %v1559 = vadd.f32 %v1449, %v1553
        %v1560 = vadd.f32 %v1455, %v1555
        %v1561 = vadd.f32 %v1461, %v1557
        %v1562 = vsel %vm1542, %v1558, %v1520
        %v1563 = vsel %vm1543, %v1559, %v1527
        %v1564 = vsel %vm1544, %v1560, %v1534
        %v1565 = vsel %vm1545, %v1561, %v1541
        %v1566 = vsel %vm468, %v1467, 0.0
        %v1567 = vrot.slane %v1566, 4
        %v1568 = vadd.f32 %v1566, %v1567
        %v1569 = vrot.slane %v1568, 2
        %v1570 = vadd.f32 %v1568, %v1569
        %v1571 = vrot.slane %v1570, 1
        %v1572 = vadd.f32 %v1570, %v1571
        %v1573 = vsel %vm468, %v1469, 0.0
        %v1574 = vrot.slane %v1573, 4
        %v1575 = vadd.f32 %v1573, %v1574
        %v1576 = vrot.slane %v1575, 2
        %v1577 = vadd.f32 %v1575, %v1576
        %v1578 = vrot.slane %v1577, 1
        %v1579 = vadd.f32 %v1577, %v1578
        %v1580 = vsel %vm468, %v1471, 0.0
        %v1581 = vrot.slane %v1580, 4
        %v1582 = vadd.f32 %v1580, %v1581
        %v1583 = vrot.slane %v1582, 2
        %v1584 = vadd.f32 %v1582, %v1583
        %v1585 = vrot.slane %v1584, 1
        %v1586 = vadd.f32 %v1584, %v1585
        %v1587 = vsel %vm468, %v1473, 0.0
        %v1588 = vrot.slane %v1587, 4
        %v1589 = vadd.f32 %v1587, %v1588
        %v1590 = vrot.slane %v1589, 2
        %v1591 = vadd.f32 %v1589, %v1590
        %v1592 = vrot.slane %v1591, 1
        %v1593 = vadd.f32 %v1591, %v1592
        %v1594 = vsel %vm468, %v1430, -inf
        %v1595 = vrot.slane %v1594, 4
        %v1596 = vmax.f32 %v1594, %v1595
        %v1597 = vrot.slane %v1596, 2
        %v1598 = vmax.f32 %v1596, %v1597
        %v1599 = vrot.slane %v1598, 1
        %v1600 = vmax.f32 %v1598, %v1599
        %v1601 = vsel %vm468, %v1431, -inf
        %v1602 = vrot.slane %v1601, 4
        %v1603 = vmax.f32 %v1601, %v1602
        %v1604 = vrot.slane %v1603, 2
        %v1605 = vmax.f32 %v1603, %v1604
        %v1606 = vrot.slane %v1605, 1
        %v1607 = vmax.f32 %v1605, %v1606
        %v1608 = vsel %vm468, %v1432, -inf
        %v1609 = vrot.slane %v1608, 4
        %v1610 = vmax.f32 %v1608, %v1609
        %v1611 = vrot.slane %v1610, 2
        %v1612 = vmax.f32 %v1610, %v1611
        %v1613 = vrot.slane %v1612, 1
        %v1614 = vmax.f32 %v1612, %v1613
        %v1615 = vsel %vm468, %v1433, -inf
        %v1616 = vrot.slane %v1615, 4
        %v1617 = vmax.f32 %v1615, %v1616
        %v1618 = vrot.slane %v1617, 2
        %v1619 = vmax.f32 %v1617, %v1618
        %v1620 = vrot.slane %v1619, 1
        %v1621 = vmax.f32 %v1619, %v1620
        %vm1622 = vcmp.gt.f32.partialorder %v1572, 1e-30
        %vm1623 = vcmp.gt.f32.partialorder %v1579, 1e-30
        %vm1624 = vcmp.gt.f32.partialorder %v1586, 1e-30
        %vm1625 = vcmp.gt.f32.partialorder %v1593, 1e-30
        %v1626 = vmax.f32 %v1572, 1e-37
        %v1627 = vmax.f32 %v1579, 1e-37
        %v1628 = vmax.f32 %v1586, 1e-37
        %v1629 = vmax.f32 %v1593, 1e-37
        %v1630 = vlog2.pop %v1626
        %v1631 = vmul.f32 %v1630, 0.6931472
        %v1632 = vlog2.pop %v1627
        %v1633 = vmul.f32 %v1632, 0.6931472
        %v1634 = vlog2.pop %v1628
        %v1635 = vmul.f32 %v1634, 0.6931472
        %v1636 = vlog2.pop %v1629
        %v1637 = vmul.f32 %v1636, 0.6931472
        %v1638 = vadd.f32 %v1443, %v1631
        %v1639 = vadd.f32 %v1449, %v1633
        %v1640 = vadd.f32 %v1455, %v1635
        %v1641 = vadd.f32 %v1461, %v1637
        %v1642 = vsel %vm1622, %v1638, %v1600
        %v1643 = vsel %vm1623, %v1639, %v1607
        %v1644 = vsel %vm1624, %v1640, %v1614
        %v1645 = vsel %vm1625, %v1641, %v1621
        %vm1646 = vcmp.ne.s32.totalorder %v1435, 255
        %s1647 = sadd.s32 %s332, 1024
        %v1648 = vstv %s1647
        %v1649 = vadd.s32 %v1648, %v328
        %v1650 = vadd.s32 %v1648, %v329
        %v1651 = vadd.s32 %v1648, %v330
        %v1652 = vadd.s32 %v1648, %v331
        %vm1653 = vcmp.lt.s32.totalorder %v1649, 1600
        %vm1654 = vcmp.lt.s32.totalorder %v1650, 1600
        %vm1655 = vcmp.lt.s32.totalorder %v1651, 1600
        %vm1656 = vcmp.lt.s32.totalorder %v1652, 1600
        %v1657 = vsel %vm1653, 1, 0
        %v1658 = vsel %vm1654, 1, 0
        %v1659 = vsel %vm1655, 1, 0
        %v1660 = vsel %vm1656, 1, 0
        %v1661 = vcombine.low %v1657, %v1658
        %v1662 = vcombine.low %v1659, %v1660
        %v1664 = vunpack.c.l.s4 1966171168
        %v1665 = vunpack.c.0.s8 %v1664
        %v1666 = vlaneseq
        %v1667 = vshrl.u32 %v1666, 7
        %v1668 = vsub.s32 %v1665, %v1667
        %v1669 = vrot.slane %v1661, %v1668
        %v1671 = vunpack.c.l.s4 1966171168
        %v1672 = vunpack.c.0.s8 %v1671
        %v1673 = vlaneseq
        %v1674 = vshrl.u32 %v1673, 7
        %v1675 = vsub.s32 %v1672, %v1674
        %v1676 = vrot.slane %v1662, %v1675
        %v1677 = vcombine.low %v1669, %v1676
        %v1679 = vunpack.c.l.s4 1966171168
        %v1680 = vunpack.c.0.s8 %v1679
        %v1681 = vlaneseq
        %v1682 = vshrl.u32 %v1681, 7
        %v1683 = vsub.s32 %v1680, %v1682
        %v1684 = vrot.slane %v1677, %v1683
        %vm1685 = vcmp.ne.s32.totalorder %v1684, 0
        %vm1686 = vmand %vm1646, %vm1685
        %vm1687 = vcmp.eq.s32.totalorder %v1435, 255
        %v1688 = vsel %vm1687, 0, %v1435
        %v1690 = vcombine.high %v1437, %v1437
        %v1692 = vunpack.c.l.s4 1983009808
        %v1693 = vunpack.c.0.s8 %v1692
        %v1694 = vlaneseq
        %v1695 = vshrl.u32 %v1694, 7
        %v1696 = vsub.s32 %v1693, %v1695
        %v1697 = vrot.slane %v1437, %v1696
        %v1699 = vunpack.c.l.s4 1983009808
        %v1700 = vunpack.c.0.s8 %v1699
        %v1701 = vlaneseq
        %v1702 = vshrl.u32 %v1701, 7
        %v1703 = vsub.s32 %v1700, %v1702
        %v1704 = vrot.slane %v1690, %v1703
        %v1705 = vcombine.high %v1697, %v1697
        %v1706 = vcombine.high %v1704, %v1704
        %v1711 = vsel %vm614, %v1697, -inf
        %v1712 = vrot.slane %v1711, 4
        %v1713 = vmax.f32 %v1711, %v1712
        %v1714 = vrot.slane %v1713, 2
        %v1715 = vmax.f32 %v1713, %v1714
        %v1716 = vrot.slane %v1715, 1
        %v1717 = vmax.f32 %v1715, %v1716
        %v1718 = vsel %vm614, %v1705, -inf
        %v1719 = vrot.slane %v1718, 4
        %v1720 = vmax.f32 %v1718, %v1719
        %v1721 = vrot.slane %v1720, 2
        %v1722 = vmax.f32 %v1720, %v1721
        %v1723 = vrot.slane %v1722, 1
        %v1724 = vmax.f32 %v1722, %v1723
        %v1725 = vsel %vm614, %v1704, -inf
        %v1726 = vrot.slane %v1725, 4
        %v1727 = vmax.f32 %v1725, %v1726
        %v1728 = vrot.slane %v1727, 2
        %v1729 = vmax.f32 %v1727, %v1728
        %v1730 = vrot.slane %v1729, 1
        %v1731 = vmax.f32 %v1729, %v1730
        %v1732 = vsel %vm614, %v1706, -inf
        %v1733 = vrot.slane %v1732, 4
        %v1734 = vmax.f32 %v1732, %v1733
        %v1735 = vrot.slane %v1734, 2
        %v1736 = vmax.f32 %v1734, %v1735
        %v1737 = vrot.slane %v1736, 1
        %v1738 = vmax.f32 %v1736, %v1737
        %vm1739 = vcmp.gt.f32.partialorder %v1717, 0.5
        %vm1740 = vcmp.gt.f32.partialorder %v1724, 0.5
        %vm1741 = vcmp.gt.f32.partialorder %v1731, 0.5
        %vm1742 = vcmp.gt.f32.partialorder %v1738, 0.5
        %v1743 = vsel %vm1739, 1.0, %v1717
        %v1744 = vsel %vm1740, 1.0, %v1724
        %v1745 = vsel %vm1741, 1.0, %v1731
        %v1746 = vsel %vm1742, 1.0, %v1738
        %vm1747 = vcmp.eq.s32.totalorder %v1688, 0
        %v1752 = vcombine.low %v1743, %v1744
        %v1753 = vcombine.low %v1745, %v1746
        %v1755 = vunpack.c.l.s4 1966171168
        %v1756 = vunpack.c.0.s8 %v1755
        %v1757 = vlaneseq
        %v1758 = vshrl.u32 %v1757, 7
        %v1759 = vsub.s32 %v1756, %v1758
        %v1760 = vrot.slane %v1752, %v1759
        %v1762 = vunpack.c.l.s4 1966171168
        %v1763 = vunpack.c.0.s8 %v1762
        %v1764 = vlaneseq
        %v1765 = vshrl.u32 %v1764, 7
        %v1766 = vsub.s32 %v1763, %v1765
        %v1767 = vrot.slane %v1753, %v1766
        %v1768 = vcombine.low %v1760, %v1767
        %v1770 = vunpack.c.l.s4 1966171168
        %v1771 = vunpack.c.0.s8 %v1770
        %v1772 = vlaneseq
        %v1773 = vshrl.u32 %v1772, 7
        %v1774 = vsub.s32 %v1771, %v1773
        %v1775 = vrot.slane %v1768, %v1774
        %v1777 = vsel %vm1747, %v1775, 0.0
        %v1778 = vsub.f32 1.0, %v1777
        %v1779 = vmul.f32 %v1778, %v1778
        %vm1780 = vcmp.eq.s32.totalorder %v1435, 0
        %v1781 = vsub.f32 %v1430, %v1506
        %v1782 = vsub.f32 %v1431, %v1507
        %v1783 = vsub.f32 %v1432, %v1508
        %v1784 = vsub.f32 %v1433, %v1509
        %v1785 = vsub.f32 %v1562, %v1506
        %v1786 = vsub.f32 %v1563, %v1507
        %v1787 = vsub.f32 %v1564, %v1508
        %v1788 = vsub.f32 %v1565, %v1509
        %v1793 = vcombine.low %v1781, %v1782
        %v1794 = vcombine.low %v1783, %v1784
        %v1796 = vunpack.c.l.s4 1966171168
        %v1797 = vunpack.c.0.s8 %v1796
        %v1798 = vlaneseq
        %v1799 = vshrl.u32 %v1798, 7
        %v1800 = vsub.s32 %v1797, %v1799
        %v1801 = vrot.slane %v1793, %v1800
        %v1803 = vunpack.c.l.s4 1966171168
        %v1804 = vunpack.c.0.s8 %v1803
        %v1805 = vlaneseq
        %v1806 = vshrl.u32 %v1805, 7
        %v1807 = vsub.s32 %v1804, %v1806
        %v1808 = vrot.slane %v1794, %v1807
        %v1809 = vcombine.low %v1801, %v1808
        %v1811 = vunpack.c.l.s4 1966171168
        %v1812 = vunpack.c.0.s8 %v1811
        %v1813 = vlaneseq
        %v1814 = vshrl.u32 %v1813, 7
        %v1815 = vsub.s32 %v1812, %v1814
        %v1816 = vrot.slane %v1809, %v1815
        %v1822 = vcombine.low %v1785, %v1786
        %v1823 = vcombine.low %v1787, %v1788
        %v1825 = vunpack.c.l.s4 1966171168
        %v1826 = vunpack.c.0.s8 %v1825
        %v1827 = vlaneseq
        %v1828 = vshrl.u32 %v1827, 7
        %v1829 = vsub.s32 %v1826, %v1828
        %v1830 = vrot.slane %v1822, %v1829
        %v1832 = vunpack.c.l.s4 1966171168
        %v1833 = vunpack.c.0.s8 %v1832
        %v1834 = vlaneseq
        %v1835 = vshrl.u32 %v1834, 7
        %v1836 = vsub.s32 %v1833, %v1835
        %v1837 = vrot.slane %v1823, %v1836
        %v1838 = vcombine.low %v1830, %v1837
        %v1840 = vunpack.c.l.s4 1966171168
        %v1841 = vunpack.c.0.s8 %v1840
        %v1842 = vlaneseq
        %v1843 = vshrl.u32 %v1842, 7
        %v1844 = vsub.s32 %v1841, %v1843
        %v1845 = vrot.slane %v1838, %v1844
        %v1847 = vsel %vm1780, %v1816, %v1845
        %v1848 = vsub.f32 0.0, %v1847
        %v1849 = vmul.f32 %v1848, %v1779
        %v1850 = vsel %vm1686, %v1849, 0.0
        %vm1851 = vcmp.lt.s32.totalorder %v1435, 4
        %v1852 = vsel %vm1851, 0, %v1435
        %v1853 = vlaneseq
        %v1854 = vshrl.u32 %v1853, 7
        %v1855 = vsub.s32 0, %v1854
        %v1856 = vrot.slane %v1852, %v1855
        %v1857 = vlaneseq
        %v1858 = vshrl.u32 %v1857, 7
        %v1859 = vsub.s32 1, %v1858
        %v1860 = vrot.slane %v1852, %v1859
        %v1861 = vlaneseq
        %v1862 = vshrl.u32 %v1861, 7
        %v1863 = vsub.s32 2, %v1862
        %v1864 = vrot.slane %v1852, %v1863
        %v1865 = vlaneseq
        %v1866 = vshrl.u32 %v1865, 7
        %v1867 = vsub.s32 3, %v1866
        %v1868 = vrot.slane %v1852, %v1867
        %vm1869 = vcmp.eq.s32.totalorder %v326, %v1856
        %vm1870 = vcmp.eq.s32.totalorder %v326, %v1860
        %vm1871 = vcmp.eq.s32.totalorder %v326, %v1864
        %vm1872 = vcmp.eq.s32.totalorder %v326, %v1868
        %v1873 = vsel %vm1869, %v1430, 0.0
        %v1874 = vsel %vm1870, %v1431, 0.0
        %v1875 = vsel %vm1871, %v1432, 0.0
        %v1876 = vsel %vm1872, %v1433, 0.0
        %v1877 = vrot.slane %v1873, 4
        %v1878 = vadd.f32 %v1873, %v1877
        %v1879 = vrot.slane %v1878, 2
        %v1880 = vadd.f32 %v1878, %v1879
        %v1881 = vrot.slane %v1880, 1
        %v1882 = vadd.f32 %v1880, %v1881
        %v1883 = vrot.slane %v1874, 4
        %v1884 = vadd.f32 %v1874, %v1883
        %v1885 = vrot.slane %v1884, 2
        %v1886 = vadd.f32 %v1884, %v1885
        %v1887 = vrot.slane %v1886, 1
        %v1888 = vadd.f32 %v1886, %v1887
        %v1889 = vrot.slane %v1875, 4
        %v1890 = vadd.f32 %v1875, %v1889
        %v1891 = vrot.slane %v1890, 2
        %v1892 = vadd.f32 %v1890, %v1891
        %v1893 = vrot.slane %v1892, 1
        %v1894 = vadd.f32 %v1892, %v1893
        %v1895 = vrot.slane %v1876, 4
        %v1896 = vadd.f32 %v1876, %v1895
        %v1897 = vrot.slane %v1896, 2
        %v1898 = vadd.f32 %v1896, %v1897
        %v1899 = vrot.slane %v1898, 1
        %v1900 = vadd.f32 %v1898, %v1899
        %v1901 = vsub.f32 %v1642, %v1506
        %v1902 = vsub.f32 %v1643, %v1507
        %v1903 = vsub.f32 %v1644, %v1508
        %v1904 = vsub.f32 %v1645, %v1509
        %vm1905 = vcmp.eq.s32.totalorder %v1852, 0
        %v1906 = vsub.f32 %v1882, %v1506
        %v1907 = vsub.f32 %v1888, %v1507
        %v1908 = vsub.f32 %v1894, %v1508
        %v1909 = vsub.f32 %v1900, %v1509
        %v1914 = vcombine.low %v1901, %v1902
        %v1915 = vcombine.low %v1903, %v1904
        %v1917 = vunpack.c.l.s4 1966171168
        %v1918 = vunpack.c.0.s8 %v1917
        %v1919 = vlaneseq
        %v1920 = vshrl.u32 %v1919, 7
        %v1921 = vsub.s32 %v1918, %v1920
        %v1922 = vrot.slane %v1914, %v1921
        %v1924 = vunpack.c.l.s4 1966171168
        %v1925 = vunpack.c.0.s8 %v1924
        %v1926 = vlaneseq
        %v1927 = vshrl.u32 %v1926, 7
        %v1928 = vsub.s32 %v1925, %v1927
        %v1929 = vrot.slane %v1915, %v1928
        %v1930 = vcombine.low %v1922, %v1929
        %v1932 = vunpack.c.l.s4 1966171168
        %v1933 = vunpack.c.0.s8 %v1932
        %v1934 = vlaneseq
        %v1935 = vshrl.u32 %v1934, 7
        %v1936 = vsub.s32 %v1933, %v1935
        %v1937 = vrot.slane %v1930, %v1936
        %v1943 = vcombine.low %v1906, %v1907
        %v1944 = vcombine.low %v1908, %v1909
        %v1946 = vunpack.c.l.s4 1966171168
        %v1947 = vunpack.c.0.s8 %v1946
        %v1948 = vlaneseq
        %v1949 = vshrl.u32 %v1948, 7
        %v1950 = vsub.s32 %v1947, %v1949
        %v1951 = vrot.slane %v1943, %v1950
        %v1953 = vunpack.c.l.s4 1966171168
        %v1954 = vunpack.c.0.s8 %v1953
        %v1955 = vlaneseq
        %v1956 = vshrl.u32 %v1955, 7
        %v1957 = vsub.s32 %v1954, %v1956
        %v1958 = vrot.slane %v1944, %v1957
        %v1959 = vcombine.low %v1951, %v1958
        %v1961 = vunpack.c.l.s4 1966171168
        %v1962 = vunpack.c.0.s8 %v1961
        %v1963 = vlaneseq
        %v1964 = vshrl.u32 %v1963, 7
        %v1965 = vsub.s32 %v1962, %v1964
        %v1966 = vrot.slane %v1959, %v1965
        %v1968 = vsel %vm1905, %v1937, %v1966
        %v1969 = vsub.f32 0.0, %v1968
        %v1970 = vsel %vm1686, %v1969, 0.0
        %v1971 = vld [vmem:[#allocation2] sm:$0xf]
        %v1972 = vadd.f32 %v1850, %v1970
        %v1973 = vadd.f32 %v1971, %v1972
        %1974 = vst.msk [vmem:[#allocation2] sm:$0xf] %vm881, %v1973
        %p1975 = scmp.eq.s32.totalorder %s28, 1
        // Predicated region
        $region49: #{tpu_custom_call.1} parent=31 // pred_check
          %p1976 = pneg %p1975
        $region50: #{tpu_custom_call.1} parent=31 // pred_check_branch
          %1978 = sbr.rel (%p1976) target = $region52
        $region51: #{tpu_custom_call.1} parent=31 // pred_region
          %v1979 = vld [vmem:[#allocation2] sm:$0xf]
          %1980 = vst.msk [vmem:[%s300] sm:$0xf] %vm881, %v1979
        $region52: #{tpu_custom_call.1} parent=31 // pred_fallthru
          _
        %s1981 = sand.u32 %s127, 1
        %s1982 = scalar_lea.sflag [#allocation5], %s1981
        %s1983 = sand.u32 %s127, 1
        %s1984 = smul.addr %s1983, 4
        %s1985 = scalar_lea.vmem [#allocation9], %s1984
        // Predicated region
        $region53: #{tpu_custom_call.1} parent=31 // pred_check
          %p1986 = pneg %p137
        $region54: #{tpu_custom_call.1} parent=31 // pred_check_branch
          %1988 = sbr.rel (%p1986) target = $region56
        $region55: #{tpu_custom_call.1} parent=31 // pred_region
          %s1990 = ssub.s32 64, 64
          %1991 = vsyncadd %s1982, %s1990
          %s1992 = smul.addr %s27, 4
          %s1993 = smul.addr %s1992, 16
          %s1994 = scalar_lea.hbm %s3, %s1993
          %s1996 = sshll.u32 %s1985, 4
          %s1997 = int_to_ptr.vmem [resolvable:$true] %s1996
          %1999 = dma.vmem_to_hbm [thread:$0]  %s1997, 64, %s1994, %s1982
        $region56: #{tpu_custom_call.1} parent=31 // pred_fallthru
          _
      $region32: #{tpu_custom_call.1} parent=5 // pred_fallthru
        _
      %p2000 = scmp.le.s32.totalorder 2, %s18
      // Predicated region
      $region57: #{tpu_custom_call.1} parent=5 // pred_check
        %p2001 = pneg %p2000
      $region58: #{tpu_custom_call.1} parent=5 // pred_check_branch
        %2003 = sbr.rel (%p2001) target = $region60
      $region59: #{tpu_custom_call.1} parent=5 // pred_region
        %s2004 = ssub.s32 %s18, 2
        // Predicated region
        $region61: #{tpu_custom_call.1} parent=59 // pred_check
          %p2005 = pneg %p143
        $region62: #{tpu_custom_call.1} parent=59 // pred_check_branch
          %2007 = sbr.rel (%p2005) target = $region64
        $region63: #{tpu_custom_call.1} parent=59 // pred_region
          %s2008 = sand.u32 %s128, 1
          %s2009 = scalar_lea.sflag [#allocation5], %s2008
          %s2010 = sand.u32 %s128, 1
          %s2011 = smul.addr %s2010, 4
          %s2012 = scalar_lea.vmem [#allocation9], %s2011
          %2013 = dma.done %s2009, 64
        $region64: #{tpu_custom_call.1} parent=59 // pred_fallthru
          _
      $region60: #{tpu_custom_call.1} parent=5 // pred_fallthru
        _
    $region6: #{tpu_custom_call.1} parent=1 // loop_footer
      %s22 = sadd.s32 1, %s18
    $region7: #{tpu_custom_call.1} parent=1 // loop_footer_branch
      %17 = sbr.rel target = $region3
    $region8: #{tpu_custom_call.1} parent=1 // loop_exit
      _
    %2014 = vsyncpa [#allocation4], 1
    %s2015 = scalar_lea.sflag [#allocation4], 1
    %2016 = vsyncpa %s2015, 1
    %2017 = vsyncpa [#allocation7], 1
    %s2018 = scalar_lea.sflag [#allocation7], 1
    %2019 = vsyncpa %s2018, 1
    %2020 = vsyncpa [#allocation5], 1
    %s2021 = scalar_lea.sflag [#allocation5], 1
    %2022 = vsyncpa %s2021, 1

</llo_original>
